<compile_context>
chip_gen: v7x
topology: tpu7x:2x2x1
jax: 0.10.0
libtpu: 0.0.40
codegen_flags: <defaults>
</compile_context>

<pallas_src>
import jax
import jax.numpy as jnp
from jax import lax
from jax.experimental import pallas as pl
from jax.experimental.pallas import tpu as pltpu


def _sigmoid(x):
    # 1 / (1 + e^-x); the reciprocal rides the otherwise-idle EUP slot.
    return pl.reciprocal(1.0 + jnp.exp(-x), approx=True)


def _selu(x):
    alpha = 1.6732632423543772848170429916717
    scale = 1.0507009873554804934193349852946
    return scale * jnp.where(x > 0, x, alpha * (jnp.exp(x) - 1.0))


def _bf16(x):
    return x.astype(jnp.bfloat16)


# ----------------------------------------------------------------------------
# Kernel 1: GRU step + batched attention + pointer head (single grid point).
# ----------------------------------------------------------------------------
def pgn_state_kernel(
    x_ref, h0_ref, enc_ref, mask_ref,
    wih_ref, whh_ref, bih_ref, bhh_ref,
    Wh_ref, Ws_ref, batt_ref, v_ref,
    wp_ref, bpx_ref,
    hid_ref, gstate_ref, p_ref, attn_ref, oov_ref,
):
    B, H = x_ref.shape
    S = mask_ref.shape[1]

    x = x_ref[...]                       # (B, H)  previous word embedding
    h0 = h0_ref[...]                     # (B, H)  previous hidden state

    # ---- single-step, single-layer GRU cell (PyTorch gate order: r, z, n) ----
    gi = jnp.dot(_bf16(x), wih_ref[...], preferred_element_type=jnp.float32) + bih_ref[...]
    gh = jnp.dot(_bf16(h0), whh_ref[...], preferred_element_type=jnp.float32) + bhh_ref[...]
    r = _sigmoid(gi[:, 0:H] + gh[:, 0:H])
    z = _sigmoid(gi[:, H:2 * H] + gh[:, H:2 * H])
    n = jnp.tanh(gi[:, 2 * H:3 * H] + r * gh[:, 2 * H:3 * H])
    dec = (1.0 - z) * n + z * h0                                  # (B, H)
    hid_ref[...] = dec

    # ---- batched additive attention over all (b, s) rows at once ----
    enc = enc_ref[...]                                            # (B*S, H), row = b*S + s
    x1 = jnp.dot(_bf16(enc), Wh_ref[...], preferred_element_type=jnp.float32)      # (B*S, H)
    x2 = jnp.dot(_bf16(dec), Ws_ref[...], preferred_element_type=jnp.float32) + batt_ref[...]  # (B, H)
    # broadcast x2[b] over the S rows of batch b with a 0/1 selection matmul
    r_idx = lax.broadcasted_iota(jnp.int32, (B * S, B), 0)
    b_idx = lax.broadcasted_iota(jnp.int32, (B * S, B), 1)
    sel = jnp.logical_and(r_idx >= b_idx * S, r_idx < (b_idx + 1) * S).astype(jnp.float32)
    x2_full = jnp.dot(sel, x2, preferred_element_type=jnp.float32)                 # (B*S, H)

    t = jnp.tanh(x1 + x2_full)                                    # (B*S, H)
    sc = jnp.sum(t * v_ref[...], axis=1, keepdims=True)           # (B*S, 1) lane reduce

    # softmax over the sequence axis (per-batch sublane reduction)
    sc3 = sc.reshape(B, S, 1)
    m = jnp.max(sc3, axis=1, keepdims=True)
    ex = jnp.exp(sc3 - m)
    attn3 = ex * pl.reciprocal(jnp.sum(ex, axis=1, keepdims=True), approx=True)    # (B, S, 1)

    # context vector: attention-weighted sum over S
    enc3 = enc.reshape(B, S, H)
    ctx = jnp.sum(attn3 * enc3, axis=1)                           # (B, H)

    # lane-dense (B, S) attention distribution for output
    attn_bs = attn3.reshape(B, S)
    attn_ref[...] = attn_bs

    # fused global state [dec | ctx] (PyTorch order) emitted in bf16 for kernel 2
    gstate_ref[...] = _bf16(jnp.concatenate([dec, ctx], axis=1))  # (B, 2H)

    # ---- pointer probability p, fused head over [ctx | dec | x] ----
    gs3 = jnp.concatenate([ctx, dec, x], axis=1)                  # (B, 3H)
    p = _sigmoid(jnp.sum(gs3 * wp_ref[...], axis=1, keepdims=True) + bpx_ref[...])  # (B, 1)
    p_ref[...] = p

    # pointer (oov) distribution, scaled by (1-p) and masked — lane-dense (B, S)
    oov_ref[...] = (1.0 - p) * attn_bs * mask_ref[...]


# ----------------------------------------------------------------------------
# Kernel 2: vocab projection p * selu([dec|ctx] @ W + b), tiled over V.
# ----------------------------------------------------------------------------
def pgn_vocab_kernel(gs_ref, p_ref, w_ref, b_ref, vocab_ref):
    logits = jnp.dot(gs_ref[...], w_ref[...], preferred_element_type=jnp.float32) + b_ref[...]
    vocab_ref[...] = p_ref[...] * _selu(logits)                   # (B, tn) f32


def init_params(key, vocab_size, hidden_size):
    H, V = hidden_size, vocab_size
    ks = jax.random.split(key, 12)

    def g(k, shape, dtype=jnp.bfloat16, scale=0.1):
        return (scale * jax.random.normal(k, shape)).astype(dtype)

    return dict(
        # GRU (weights stored transposed so the kernel does x @ W), gate order r,z,n
        w_ih_t=g(ks[0], (H, 3 * H)), w_hh_t=g(ks[1], (H, 3 * H)),
        b_ih=g(ks[2], (1, 3 * H), jnp.float32), b_hh=g(ks[3], (1, 3 * H), jnp.float32),
        # additive attention
        Wh=g(ks[4], (H, H)), Ws=g(ks[5], (H, H)),
        b_att=g(ks[6], (1, H), jnp.float32), v_row=g(ks[7], (1, H), jnp.float32),
        # output projection Linear(2H, V), stored transposed, input order [dec | ctx]
        w_out_t=g(ks[8], (2 * H, V)),
        b_out=g(ks[9], (1, V), jnp.float32),
        # pointer heads fused into one row: [w_ph (ctx) | w_ps (dec) | w_px (x)]
        w_p_row=g(ks[10], (1, 3 * H), jnp.float32),
        b_px=g(ks[11], (1, 1), jnp.float32),
    )


def _vocab_tiling(V):
    """Returns (tile_n, padded_V)."""
    for tn in (2048, 1024, 512, 256, 128):
        if V % tn == 0:
            return tn, V
    tn = 512
    return tn, pl.cdiv(V, tn) * tn


def pgn_decoder_forward(params, inp, encoder_states, oov_enc_mask, hidden=None):
    """inp: (1,B,H), encoder_states: (S,B,H), oov_enc_mask: (S,B), hidden: (1,B,H)|None."""
    _, B, H = inp.shape
    S = encoder_states.shape[0]
    V = params["b_out"].shape[1]

    x = inp[0].astype(jnp.float32)
    h0 = jnp.zeros((B, H), jnp.float32) if hidden is None else hidden[0].astype(jnp.float32)
    enc_flat = jnp.transpose(encoder_states, (1, 0, 2)).reshape(B * S, H).astype(jnp.float32)
    mask_bs = oov_enc_mask.astype(jnp.float32).T                   # (B, S)

    def fs(shape):
        return pl.BlockSpec(shape, lambda i, _s=shape: (0,) * len(_s))

    state_args = (x, h0, enc_flat, mask_bs,
                  params["w_ih_t"], params["w_hh_t"], params["b_ih"], params["b_hh"],
                  params["Wh"], params["Ws"], params["b_att"], params["v_row"],
                  params["w_p_row"], params["b_px"])

    state_out_shapes = (
        jax.ShapeDtypeStruct((B, H), jnp.float32),        # new hidden / decoder state
        jax.ShapeDtypeStruct((B, 2 * H), jnp.bfloat16),   # global state [dec | ctx]
        jax.ShapeDtypeStruct((B, 1), jnp.float32),        # p
        jax.ShapeDtypeStruct((B, S), jnp.float32),        # attention distribution (B,S)
        jax.ShapeDtypeStruct((B, S), jnp.float32),        # (1-p) * attn * mask      (B,S)
    )

    hid, gstate, p, attn_bs, oov_bs = pl.pallas_call(
        pgn_state_kernel,
        out_shape=state_out_shapes,
        grid=(1,),
        in_specs=[fs(a.shape) for a in state_args],
        out_specs=tuple(fs(s.shape) for s in state_out_shapes),
        compiler_params=pltpu.CompilerParams(dimension_semantics=("arbitrary",)),
    )(*state_args)

    # ---- vocab projection, tiled & double-buffered over V ("parallel" axis) ----
    tn, Vp = _vocab_tiling(V)
    w_out, b_out = params["w_out_t"], params["b_out"]
    if Vp != V:
        w_out = jnp.pad(w_out, ((0, 0), (0, Vp - V)))
        b_out = jnp.pad(b_out, ((0, 0), (0, Vp - V)))

    vocab = pl.pallas_call(
        pgn_vocab_kernel,
        out_shape=jax.ShapeDtypeStruct((B, Vp), jnp.float32),
        grid=(Vp // tn,),
        in_specs=[
            pl.BlockSpec((B, 2 * H), lambda j: (0, 0)),
            pl.BlockSpec((B, 1), lambda j: (0, 0)),
            pl.BlockSpec((2 * H, tn), lambda j: (0, j)),
            pl.BlockSpec((1, tn), lambda j: (0, j)),
        ],
        out_specs=pl.BlockSpec((B, tn), lambda j: (0, j)),
        compiler_params=pltpu.CompilerParams(dimension_semantics=("parallel",)),
    )(gstate, p, w_out, b_out)
    if Vp != V:
        vocab = vocab[:, :V]

    extended_vocab_distr = jnp.concatenate([vocab, oov_bs], axis=1)   # (B, V+S)
    hidden_out = hid[None]                                            # (1, B, H)
    p_out = p[:, 0]                                                   # (B,)
    attention_distr = attn_bs.T                                       # (S, B)
    return extended_vocab_distr, hidden_out, p_out, attention_distr


def reference_forward(params, inp, encoder_states, oov_enc_mask, hidden=None):
    """Pure-JAX f32 mirror of the PyTorch forward (weights upcast from stored dtype)."""
    f = lambda w: w.astype(jnp.float32)
    _, B, H = inp.shape
    x = inp[0].astype(jnp.float32)
    h0 = jnp.zeros((B, H), jnp.float32) if hidden is None else hidden[0].astype(jnp.float32)
    gi = x @ f(params["w_ih_t"]) + params["b_ih"]
    gh = h0 @ f(params["w_hh_t"]) + params["b_hh"]
    r = jax.nn.sigmoid(gi[:, :H] + gh[:, :H])
    z = jax.nn.sigmoid(gi[:, H:2 * H] + gh[:, H:2 * H])
    n = jnp.tanh(gi[:, 2 * H:] + r * gh[:, 2 * H:])
    dec = (1.0 - z) * n + z * h0                                      # (B, H)
    hidden_out = dec[None]

    enc = encoder_states.astype(jnp.float32)                          # (S, B, H)
    x1 = enc @ f(params["Wh"])
    x2 = dec @ f(params["Ws"])
    e = jnp.einsum("sbh,h->sb",
                   jnp.tanh(x1 + x2[None] + params["b_att"][None]), params["v_row"][0])
    attn = jax.nn.softmax(e, axis=0)                                  # (S, B)
    attn_bs = attn.T                                                  # (B, S)
    enc_bt = jnp.transpose(enc, (1, 0, 2))                            # (B, S, H)
    ctx = jnp.einsum("bs,bsh->bh", attn_bs, enc_bt)                   # (B, H)
    gs3 = jnp.concatenate([ctx, dec, x], axis=1)                      # (B, 3H)
    p = jax.nn.sigmoid(gs3 @ f(params["w_p_row"]).T + params["b_px"])  # (B, 1)
    gstate = jnp.concatenate([dec, ctx], axis=1)                      # (B, 2H)
    vocab = p * jax.nn.selu(gstate @ f(params["w_out_t"]) + params["b_out"])
    oov = (1.0 - p) * (attn_bs * oov_enc_mask.astype(jnp.float32).T)
    ext = jnp.concatenate([vocab, oov], axis=1)
    return ext, hidden_out, p[:, 0], attn


if __name__ == "__main__":
    # Lane/sublane friendly small shapes: H multiple of 128, B multiple of 8,
    # S multiple of 8; V chosen so the vocab projection tiles over 3 grid steps.
    B, H, S, V = 8, 128, 16, 1536
    key = jax.random.PRNGKey(0)
    k_par, k_x, k_enc, k_h, k_m = jax.random.split(key, 5)

    params = init_params(k_par, V, H)
    inp = jax.random.normal(k_x, (1, B, H), jnp.float32)
    encoder_states = jax.random.normal(k_enc, (S, B, H), jnp.float32)
    hidden = jax.random.normal(k_h, (1, B, H), jnp.float32)
    oov_enc_mask = (jax.random.uniform(k_m, (S, B)) < 0.3).astype(jnp.float32)

    outs = pgn_decoder_forward(params, inp, encoder_states, oov_enc_mask, hidden)
    outs = jax.block_until_ready(outs)
    refs = reference_forward(params, inp, encoder_states, oov_enc_mask, hidden)

    assert outs[0].shape == (B, V + S)
    assert outs[1].shape == (1, B, H)
    assert outs[2].shape == (B,)
    assert outs[3].shape == (S, B)
    names = ("extended_vocab_distr", "hidden", "p", "attention_distr")
    for name, o, rf in zip(names, outs, refs):
        err = jnp.max(jnp.abs(o - rf))
        assert jnp.allclose(o, rf, atol=5e-2, rtol=5e-2), (name, err)

    print("KERNEL_OK")
</pallas_src>

<mosaic_0001>
module attributes {stable_mosaic.version = 11 : i64} {
  func.func @pgn_state_kernel(%arg0: i32, %arg1: memref<8x128xf32, #tpu.memory_space<vmem>>, %arg2: memref<8x128xf32, #tpu.memory_space<vmem>>, %arg3: memref<128x128xf32, #tpu.memory_space<vmem>>, %arg4: memref<8x16xf32, #tpu.memory_space<vmem>>, %arg5: memref<128x384xbf16, #tpu.memory_space<vmem>>, %arg6: memref<128x384xbf16, #tpu.memory_space<vmem>>, %arg7: memref<1x384xf32, #tpu.memory_space<vmem>>, %arg8: memref<1x384xf32, #tpu.memory_space<vmem>>, %arg9: memref<128x128xbf16, #tpu.memory_space<vmem>>, %arg10: memref<128x128xbf16, #tpu.memory_space<vmem>>, %arg11: memref<1x128xf32, #tpu.memory_space<vmem>>, %arg12: memref<1x128xf32, #tpu.memory_space<vmem>>, %arg13: memref<1x384xf32, #tpu.memory_space<vmem>>, %arg14: memref<1x1xf32, #tpu.memory_space<vmem>>, %arg15: memref<8x128xf32, #tpu.memory_space<vmem>>, %arg16: memref<8x256xbf16, #tpu.memory_space<vmem>>, %arg17: memref<8x1xf32, #tpu.memory_space<vmem>>, %arg18: memref<8x16xf32, #tpu.memory_space<vmem>>, %arg19: memref<8x16xf32, #tpu.memory_space<vmem>>) attributes {dimension_semantics = [#tpu.dimension_semantics<arbitrary>], iteration_bounds = array<i64: 1>, scalar_prefetch = 0 : i64, scratch_operands = 0 : i64, tpu.core_type = #tpu.core_type<tc>, window_params = [{pipeline_mode = #tpu.pipeline_mode<synchronous>, transform_indices = @transform_0, window_bounds = array<i64: 8, 128>}, {pipeline_mode = #tpu.pipeline_mode<synchronous>, transform_indices = @transform_1, window_bounds = array<i64: 8, 128>}, {pipeline_mode = #tpu.pipeline_mode<synchronous>, transform_indices = @transform_2, window_bounds = array<i64: 128, 128>}, {pipeline_mode = #tpu.pipeline_mode<synchronous>, transform_indices = @transform_3, window_bounds = array<i64: 8, 16>}, {pipeline_mode = #tpu.pipeline_mode<synchronous>, transform_indices = @transform_4, window_bounds = array<i64: 128, 384>}, {pipeline_mode = #tpu.pipeline_mode<synchronous>, transform_indices = @transform_5, window_bounds = array<i64: 128, 384>}, {pipeline_mode = #tpu.pipeline_mode<synchronous>, transform_indices = @transform_6, window_bounds = array<i64: 1, 384>}, {pipeline_mode = #tpu.pipeline_mode<synchronous>, transform_indices = @transform_7, window_bounds = array<i64: 1, 384>}, {pipeline_mode = #tpu.pipeline_mode<synchronous>, transform_indices = @transform_8, window_bounds = array<i64: 128, 128>}, {pipeline_mode = #tpu.pipeline_mode<synchronous>, transform_indices = @transform_9, window_bounds = array<i64: 128, 128>}, {pipeline_mode = #tpu.pipeline_mode<synchronous>, transform_indices = @transform_10, window_bounds = array<i64: 1, 128>}, {pipeline_mode = #tpu.pipeline_mode<synchronous>, transform_indices = @transform_11, window_bounds = array<i64: 1, 128>}, {pipeline_mode = #tpu.pipeline_mode<synchronous>, transform_indices = @transform_12, window_bounds = array<i64: 1, 384>}, {pipeline_mode = #tpu.pipeline_mode<synchronous>, transform_indices = @transform_13, window_bounds = array<i64: 1, 1>}, {pipeline_mode = #tpu.pipeline_mode<synchronous>, transform_indices = @transform_14, window_bounds = array<i64: 8, 128>}, {pipeline_mode = #tpu.pipeline_mode<synchronous>, transform_indices = @transform_15, window_bounds = array<i64: 8, 256>}, {pipeline_mode = #tpu.pipeline_mode<synchronous>, transform_indices = @transform_16, window_bounds = array<i64: 8, 1>}, {pipeline_mode = #tpu.pipeline_mode<synchronous>, transform_indices = @transform_17, window_bounds = array<i64: 8, 16>}, {pipeline_mode = #tpu.pipeline_mode<synchronous>, transform_indices = @transform_18, window_bounds = array<i64: 8, 16>}]} {
    %c0 = arith.constant 0 : index
    %c0_0 = arith.constant 0 : index
    %0 = vector.load %arg1[%c0, %c0_0] : memref<8x128xf32, #tpu.memory_space<vmem>>, vector<8x128xf32>
    %c0_1 = arith.constant 0 : index
    %c0_2 = arith.constant 0 : index
    %1 = vector.load %arg2[%c0_1, %c0_2] : memref<8x128xf32, #tpu.memory_space<vmem>>, vector<8x128xf32>
    %2 = arith.truncf %0 : vector<8x128xf32> to vector<8x128xbf16>
    %c0_3 = arith.constant 0 : index
    %c0_4 = arith.constant 0 : index
    %3 = vector.load %arg5[%c0_3, %c0_4] : memref<128x384xbf16, #tpu.memory_space<vmem>>, vector<128x384xbf16>
    %cst = arith.constant dense<0.000000e+00> : vector<8x384xf32>
    %4 = tpu.matmul %2, %3, %cst {dimension_numbers = #tpu.dot_dimension_numbers<[1], [0], [0], [1], [0, 0, 1, 1], [], []>} : vector<8x128xbf16>, vector<128x384xbf16>, vector<8x384xf32> -> vector<8x384xf32>
    %c0_5 = arith.constant 0 : index
    %c0_6 = arith.constant 0 : index
    %5 = vector.load %arg7[%c0_5, %c0_6] : memref<1x384xf32, #tpu.memory_space<vmem>>, vector<1x384xf32>
    %6 = vector.broadcast %5 : vector<1x384xf32> to vector<8x384xf32>
    %7 = arith.addf %4, %6 : vector<8x384xf32>
    %8 = arith.truncf %1 : vector<8x128xf32> to vector<8x128xbf16>
    %c0_7 = arith.constant 0 : index
    %c0_8 = arith.constant 0 : index
    %9 = vector.load %arg6[%c0_7, %c0_8] : memref<128x384xbf16, #tpu.memory_space<vmem>>, vector<128x384xbf16>
    %cst_9 = arith.constant dense<0.000000e+00> : vector<8x384xf32>
    %10 = tpu.matmul %8, %9, %cst_9 {dimension_numbers = #tpu.dot_dimension_numbers<[1], [0], [0], [1], [0, 0, 1, 1], [], []>} : vector<8x128xbf16>, vector<128x384xbf16>, vector<8x384xf32> -> vector<8x384xf32>
    %c0_10 = arith.constant 0 : index
    %c0_11 = arith.constant 0 : index
    %11 = vector.load %arg8[%c0_10, %c0_11] : memref<1x384xf32, #tpu.memory_space<vmem>>, vector<1x384xf32>
    %12 = vector.broadcast %11 : vector<1x384xf32> to vector<8x384xf32>
    %13 = arith.addf %10, %12 : vector<8x384xf32>
    %14 = vector.extract_strided_slice %7 {offsets = [0, 0], sizes = [8, 128], strides = [1, 1]} : vector<8x384xf32> to vector<8x128xf32>
    %15 = vector.extract_strided_slice %13 {offsets = [0, 0], sizes = [8, 128], strides = [1, 1]} : vector<8x384xf32> to vector<8x128xf32>
    %16 = arith.addf %14, %15 : vector<8x128xf32>
    %cst_12 = arith.constant 0.000000e+00 : f32
    %17 = vector.broadcast %cst_12 : f32 to vector<8x128xf32>
    %18 = arith.subf %17, %16 : vector<8x128xf32>
    %19 = math.exp %18 : vector<8x128xf32>
    %cst_13 = arith.constant 1.000000e+00 : f32
    %20 = vector.broadcast %cst_13 : f32 to vector<8x128xf32>
    %21 = arith.addf %20, %19 : vector<8x128xf32>
    %22 = tpu.reciprocal %21 {approx = true} : vector<8x128xf32> -> vector<8x128xf32>
    %23 = vector.extract_strided_slice %7 {offsets = [0, 128], sizes = [8, 128], strides = [1, 1]} : vector<8x384xf32> to vector<8x128xf32>
    %24 = vector.extract_strided_slice %13 {offsets = [0, 128], sizes = [8, 128], strides = [1, 1]} : vector<8x384xf32> to vector<8x128xf32>
    %25 = arith.addf %23, %24 : vector<8x128xf32>
    %cst_14 = arith.constant 0.000000e+00 : f32
    %26 = vector.broadcast %cst_14 : f32 to vector<8x128xf32>
    %27 = arith.subf %26, %25 : vector<8x128xf32>
    %28 = math.exp %27 : vector<8x128xf32>
    %cst_15 = arith.constant 1.000000e+00 : f32
    %29 = vector.broadcast %cst_15 : f32 to vector<8x128xf32>
    %30 = arith.addf %29, %28 : vector<8x128xf32>
    %31 = tpu.reciprocal %30 {approx = true} : vector<8x128xf32> -> vector<8x128xf32>
    %32 = vector.extract_strided_slice %7 {offsets = [0, 256], sizes = [8, 128], strides = [1, 1]} : vector<8x384xf32> to vector<8x128xf32>
    %33 = vector.extract_strided_slice %13 {offsets = [0, 256], sizes = [8, 128], strides = [1, 1]} : vector<8x384xf32> to vector<8x128xf32>
    %34 = arith.mulf %22, %33 : vector<8x128xf32>
    %35 = arith.addf %32, %34 : vector<8x128xf32>
    %36 = math.tanh %35 : vector<8x128xf32>
    %cst_16 = arith.constant 1.000000e+00 : f32
    %37 = vector.broadcast %cst_16 : f32 to vector<8x128xf32>
    %38 = arith.subf %37, %31 : vector<8x128xf32>
    %39 = arith.mulf %38, %36 : vector<8x128xf32>
    %40 = arith.mulf %31, %1 : vector<8x128xf32>
    %41 = arith.addf %39, %40 : vector<8x128xf32>
    %c0_17 = arith.constant 0 : index
    %c0_18 = arith.constant 0 : index
    %42 = vector.load %arg15[%c0_17, %c0_18] : memref<8x128xf32, #tpu.memory_space<vmem>>, vector<8x128xf32>
    tpu.vector_store %arg15[%c0_17, %c0_18], %41 {strides = array<i32>} : memref<8x128xf32, #tpu.memory_space<vmem>>, vector<8x128xf32>,
    %c0_19 = arith.constant 0 : index
    %c0_20 = arith.constant 0 : index
    %43 = vector.load %arg3[%c0_19, %c0_20] : memref<128x128xf32, #tpu.memory_space<vmem>>, vector<128x128xf32>
    %44 = arith.truncf %43 : vector<128x128xf32> to vector<128x128xbf16>
    %c0_21 = arith.constant 0 : index
    %c0_22 = arith.constant 0 : index
    %45 = vector.load %arg9[%c0_21, %c0_22] : memref<128x128xbf16, #tpu.memory_space<vmem>>, vector<128x128xbf16>
    %cst_23 = arith.constant dense<0.000000e+00> : vector<128x128xf32>
    %46 = tpu.matmul %44, %45, %cst_23 {dimension_numbers = #tpu.dot_dimension_numbers<[1], [0], [0], [1], [0, 0, 1, 1], [], []>} : vector<128x128xbf16>, vector<128x128xbf16>, vector<128x128xf32> -> vector<128x128xf32>
    %47 = arith.truncf %41 : vector<8x128xf32> to vector<8x128xbf16>
    %c0_24 = arith.constant 0 : index
    %c0_25 = arith.constant 0 : index
    %48 = vector.load %arg10[%c0_24, %c0_25] : memref<128x128xbf16, #tpu.memory_space<vmem>>, vector<128x128xbf16>
    %cst_26 = arith.constant dense<0.000000e+00> : vector<8x128xf32>
    %49 = tpu.matmul %47, %48, %cst_26 {dimension_numbers = #tpu.dot_dimension_numbers<[1], [0], [0], [1], [0, 0, 1, 1], [], []>} : vector<8x128xbf16>, vector<128x128xbf16>, vector<8x128xf32> -> vector<8x128xf32>
    %c0_27 = arith.constant 0 : index
    %c0_28 = arith.constant 0 : index
    %50 = vector.load %arg11[%c0_27, %c0_28] : memref<1x128xf32, #tpu.memory_space<vmem>>, vector<1x128xf32>
    %51 = vector.broadcast %50 : vector<1x128xf32> to vector<8x128xf32>
    %52 = arith.addf %49, %51 : vector<8x128xf32>
    %53 = tpu.iota {dimensions = array<i32: 0>} : vector<128x8xi32>
    %54 = tpu.iota {dimensions = array<i32: 1>} : vector<128x8xi32>
    %c16_i32 = arith.constant 16 : i32
    %55 = vector.broadcast %c16_i32 : i32 to vector<128x8xi32>
    %56 = arith.muli %54, %55 : vector<128x8xi32>
    %57 = arith.cmpi sge, %53, %56 : vector<128x8xi32>
    %c1_i32 = arith.constant 1 : i32
    %58 = vector.broadcast %c1_i32 : i32 to vector<128x8xi32>
    %59 = arith.addi %54, %58 : vector<128x8xi32>
    %c16_i32_29 = arith.constant 16 : i32
    %60 = vector.broadcast %c16_i32_29 : i32 to vector<128x8xi32>
    %61 = arith.muli %59, %60 : vector<128x8xi32>
    %62 = arith.cmpi slt, %53, %61 : vector<128x8xi32>
    %63 = arith.andi %57, %62 : vector<128x8xi1>
    %64 = arith.extui %63 : vector<128x8xi1> to vector<128x8xi32>
    %65 = arith.sitofp %64 : vector<128x8xi32> to vector<128x8xf32>
    %cst_30 = arith.constant dense<0.000000e+00> : vector<128x128xf32>
    %66 = tpu.matmul %65, %52, %cst_30 {dimension_numbers = #tpu.dot_dimension_numbers<[1], [0], [0], [1], [0, 0, 1, 1], [], []>} : vector<128x8xf32>, vector<8x128xf32>, vector<128x128xf32> -> vector<128x128xf32>
    %67 = arith.addf %46, %66 : vector<128x128xf32>
    %68 = math.tanh %67 : vector<128x128xf32>
    %c0_31 = arith.constant 0 : index
    %c0_32 = arith.constant 0 : index
    %69 = vector.load %arg12[%c0_31, %c0_32] : memref<1x128xf32, #tpu.memory_space<vmem>>, vector<1x128xf32>
    %70 = vector.broadcast %69 : vector<1x128xf32> to vector<128x128xf32>
    %71 = arith.mulf %68, %70 : vector<128x128xf32>
    %cst_33 = arith.constant dense<0.000000e+00> : vector<128xf32>
    %72 = vector.multi_reduction <add>, %71, %cst_33 [1] : vector<128x128xf32> to vector<128xf32>
    %73 = vector.shape_cast %72 : vector<128xf32> to vector<128x1xf32>
    %74 = vector.shape_cast %73 : vector<128x1xf32> to vector<8x16x1xf32>
    %cst_34 = arith.constant dense<0xFF800000> : vector<8x1xf32>
    %75 = vector.multi_reduction <maximumf>, %74, %cst_34 [1] : vector<8x16x1xf32> to vector<8x1xf32>
    %76 = vector.shape_cast %75 : vector<8x1xf32> to vector<8x1x1xf32>
    %77 = vector.broadcast %76 : vector<8x1x1xf32> to vector<8x16x1xf32>
    %78 = arith.subf %74, %77 : vector<8x16x1xf32>
    %79 = math.exp %78 : vector<8x16x1xf32>
    %cst_35 = arith.constant dense<0.000000e+00> : vector<8x1xf32>
    %80 = vector.multi_reduction <add>, %79, %cst_35 [1] : vector<8x16x1xf32> to vector<8x1xf32>
    %81 = vector.shape_cast %80 : vector<8x1xf32> to vector<8x1x1xf32>
    %82 = tpu.reciprocal %81 {approx = true} : vector<8x1x1xf32> -> vector<8x1x1xf32>
    %83 = vector.broadcast %82 : vector<8x1x1xf32> to vector<8x16x1xf32>
    %84 = arith.mulf %79, %83 : vector<8x16x1xf32>
    %85 = vector.shape_cast %43 : vector<128x128xf32> to vector<8x16x128xf32>
    %86 = vector.broadcast %84 : vector<8x16x1xf32> to vector<8x16x128xf32>
    %87 = arith.mulf %86, %85 : vector<8x16x128xf32>
    %cst_36 = arith.constant dense<0.000000e+00> : vector<8x128xf32>
    %88 = vector.multi_reduction <add>, %87, %cst_36 [1] : vector<8x16x128xf32> to vector<8x128xf32>
    %89 = vector.shape_cast %84 : vector<8x16x1xf32> to vector<8x16xf32>
    %c0_37 = arith.constant 0 : index
    %c0_38 = arith.constant 0 : index
    %90 = vector.load %arg18[%c0_37, %c0_38] : memref<8x16xf32, #tpu.memory_space<vmem>>, vector<8x16xf32>
    tpu.vector_store %arg18[%c0_37, %c0_38], %89 {strides = array<i32>} : memref<8x16xf32, #tpu.memory_space<vmem>>, vector<8x16xf32>,
    %91 = tpu.concatenate %41, %88 in 1 : vector<8x128xf32>, vector<8x128xf32> -> vector<8x256xf32>
    %92 = arith.truncf %91 : vector<8x256xf32> to vector<8x256xbf16>
    %c0_39 = arith.constant 0 : index
    %c0_40 = arith.constant 0 : index
    %93 = vector.load %arg16[%c0_39, %c0_40] : memref<8x256xbf16, #tpu.memory_space<vmem>>, vector<8x256xbf16>
    tpu.vector_store %arg16[%c0_39, %c0_40], %92 {strides = array<i32>} : memref<8x256xbf16, #tpu.memory_space<vmem>>, vector<8x256xbf16>,
    %94 = tpu.concatenate %88, %41, %0 in 1 : vector<8x128xf32>, vector<8x128xf32>, vector<8x128xf32> -> vector<8x384xf32>
    %c0_41 = arith.constant 0 : index
    %c0_42 = arith.constant 0 : index
    %95 = vector.load %arg13[%c0_41, %c0_42] : memref<1x384xf32, #tpu.memory_space<vmem>>, vector<1x384xf32>
    %96 = vector.broadcast %95 : vector<1x384xf32> to vector<8x384xf32>
    %97 = arith.mulf %94, %96 : vector<8x384xf32>
    %cst_43 = arith.constant dense<0.000000e+00> : vector<8xf32>
    %98 = vector.multi_reduction <add>, %97, %cst_43 [1] : vector<8x384xf32> to vector<8xf32>
    %99 = vector.shape_cast %98 : vector<8xf32> to vector<8x1xf32>
    %c0_44 = arith.constant 0 : index
    %c0_45 = arith.constant 0 : index
    %100 = vector.load %arg14[%c0_44, %c0_45] : memref<1x1xf32, #tpu.memory_space<vmem>>, vector<1x1xf32>
    %101 = vector.broadcast %100 : vector<1x1xf32> to vector<8x1xf32>
    %102 = arith.addf %99, %101 : vector<8x1xf32>
    %cst_46 = arith.constant 0.000000e+00 : f32
    %103 = vector.broadcast %cst_46 : f32 to vector<8x1xf32>
    %104 = arith.subf %103, %102 : vector<8x1xf32>
    %105 = math.exp %104 : vector<8x1xf32>
    %cst_47 = arith.constant 1.000000e+00 : f32
    %106 = vector.broadcast %cst_47 : f32 to vector<8x1xf32>
    %107 = arith.addf %106, %105 : vector<8x1xf32>
    %108 = tpu.reciprocal %107 {approx = true} : vector<8x1xf32> -> vector<8x1xf32>
    %c0_48 = arith.constant 0 : index
    %c0_49 = arith.constant 0 : index
    %109 = vector.load %arg17[%c0_48, %c0_49] : memref<8x1xf32, #tpu.memory_space<vmem>>, vector<8x1xf32>
    tpu.vector_store %arg17[%c0_48, %c0_49], %108 {strides = array<i32>} : memref<8x1xf32, #tpu.memory_space<vmem>>, vector<8x1xf32>,
    %cst_50 = arith.constant 1.000000e+00 : f32
    %110 = vector.broadcast %cst_50 : f32 to vector<8x1xf32>
    %111 = arith.subf %110, %108 : vector<8x1xf32>
    %112 = vector.broadcast %111 : vector<8x1xf32> to vector<8x16xf32>
    %113 = arith.mulf %112, %89 : vector<8x16xf32>
    %c0_51 = arith.constant 0 : index
    %c0_52 = arith.constant 0 : index
    %114 = vector.load %arg4[%c0_51, %c0_52] : memref<8x16xf32, #tpu.memory_space<vmem>>, vector<8x16xf32>
    %115 = arith.mulf %113, %114 : vector<8x16xf32>
    %c0_53 = arith.constant 0 : index
    %c0_54 = arith.constant 0 : index
    %116 = vector.load %arg19[%c0_53, %c0_54] : memref<8x16xf32, #tpu.memory_space<vmem>>, vector<8x16xf32>
    tpu.vector_store %arg19[%c0_53, %c0_54], %115 {strides = array<i32>} : memref<8x16xf32, #tpu.memory_space<vmem>>, vector<8x16xf32>,
    return
  }
  func.func @transform_0(%arg0: i32) -> (i32, i32) {
    %c0_i32 = arith.constant 0 : i32
    %c0_i32_0 = arith.constant 0 : i32
    %c0_i32_1 = arith.constant 0 : i32
    return %c0_i32, %c0_i32_0 : i32, i32
  }
  func.func @transform_1(%arg0: i32) -> (i32, i32) {
    %c0_i32 = arith.constant 0 : i32
    %c0_i32_0 = arith.constant 0 : i32
    %c0_i32_1 = arith.constant 0 : i32
    return %c0_i32, %c0_i32_0 : i32, i32
  }
  func.func @transform_2(%arg0: i32) -> (i32, i32) {
    %c0_i32 = arith.constant 0 : i32
    %c0_i32_0 = arith.constant 0 : i32
    %c0_i32_1 = arith.constant 0 : i32
    return %c0_i32, %c0_i32_0 : i32, i32
  }
  func.func @transform_3(%arg0: i32) -> (i32, i32) {
    %c0_i32 = arith.constant 0 : i32
    %c0_i32_0 = arith.constant 0 : i32
    %c0_i32_1 = arith.constant 0 : i32
    return %c0_i32, %c0_i32_0 : i32, i32
  }
  func.func @transform_4(%arg0: i32) -> (i32, i32) {
    %c0_i32 = arith.constant 0 : i32
    %c0_i32_0 = arith.constant 0 : i32
    %c0_i32_1 = arith.constant 0 : i32
    return %c0_i32, %c0_i32_0 : i32, i32
  }
  func.func @transform_5(%arg0: i32) -> (i32, i32) {
    %c0_i32 = arith.constant 0 : i32
    %c0_i32_0 = arith.constant 0 : i32
    %c0_i32_1 = arith.constant 0 : i32
    return %c0_i32, %c0_i32_0 : i32, i32
  }
  func.func @transform_6(%arg0: i32) -> (i32, i32) {
    %c0_i32 = arith.constant 0 : i32
    %c0_i32_0 = arith.constant 0 : i32
    %c0_i32_1 = arith.constant 0 : i32
    return %c0_i32, %c0_i32_0 : i32, i32
  }
  func.func @transform_7(%arg0: i32) -> (i32, i32) {
    %c0_i32 = arith.constant 0 : i32
    %c0_i32_0 = arith.constant 0 : i32
    %c0_i32_1 = arith.constant 0 : i32
    return %c0_i32, %c0_i32_0 : i32, i32
  }
  func.func @transform_8(%arg0: i32) -> (i32, i32) {
    %c0_i32 = arith.constant 0 : i32
    %c0_i32_0 = arith.constant 0 : i32
    %c0_i32_1 = arith.constant 0 : i32
    return %c0_i32, %c0_i32_0 : i32, i32
  }
  func.func @transform_9(%arg0: i32) -> (i32, i32) {
    %c0_i32 = arith.constant 0 : i32
    %c0_i32_0 = arith.constant 0 : i32
    %c0_i32_1 = arith.constant 0 : i32
    return %c0_i32, %c0_i32_0 : i32, i32
  }
  func.func @transform_10(%arg0: i32) -> (i32, i32) {
    %c0_i32 = arith.constant 0 : i32
    %c0_i32_0 = arith.constant 0 : i32
    %c0_i32_1 = arith.constant 0 : i32
    return %c0_i32, %c0_i32_0 : i32, i32
  }
  func.func @transform_11(%arg0: i32) -> (i32, i32) {
    %c0_i32 = arith.constant 0 : i32
    %c0_i32_0 = arith.constant 0 : i32
    %c0_i32_1 = arith.constant 0 : i32
    return %c0_i32, %c0_i32_0 : i32, i32
  }
  func.func @transform_12(%arg0: i32) -> (i32, i32) {
    %c0_i32 = arith.constant 0 : i32
    %c0_i32_0 = arith.constant 0 : i32
    %c0_i32_1 = arith.constant 0 : i32
    return %c0_i32, %c0_i32_0 : i32, i32
  }
  func.func @transform_13(%arg0: i32) -> (i32, i32) {
    %c0_i32 = arith.constant 0 : i32
    %c0_i32_0 = arith.constant 0 : i32
    %c0_i32_1 = arith.constant 0 : i32
    return %c0_i32, %c0_i32_0 : i32, i32
  }
  func.func @transform_14(%arg0: i32) -> (i32, i32) {
    %c0_i32 = arith.constant 0 : i32
    %c0_i32_0 = arith.constant 0 : i32
    %c0_i32_1 = arith.constant 0 : i32
    return %c0_i32, %c0_i32_0 : i32, i32
  }
  func.func @transform_15(%arg0: i32) -> (i32, i32) {
    %c0_i32 = arith.constant 0 : i32
    %c0_i32_0 = arith.constant 0 : i32
    %c0_i32_1 = arith.constant 0 : i32
    return %c0_i32, %c0_i32_0 : i32, i32
  }
  func.func @transform_16(%arg0: i32) -> (i32, i32) {
    %c0_i32 = arith.constant 0 : i32
    %c0_i32_0 = arith.constant 0 : i32
    %c0_i32_1 = arith.constant 0 : i32
    return %c0_i32, %c0_i32_0 : i32, i32
  }
  func.func @transform_17(%arg0: i32) -> (i32, i32) {
    %c0_i32 = arith.constant 0 : i32
    %c0_i32_0 = arith.constant 0 : i32
    %c0_i32_1 = arith.constant 0 : i32
    return %c0_i32, %c0_i32_0 : i32, i32
  }
  func.func @transform_18(%arg0: i32) -> (i32, i32) {
    %c0_i32 = arith.constant 0 : i32
    %c0_i32_0 = arith.constant 0 : i32
    %c0_i32_1 = arith.constant 0 : i32
    return %c0_i32, %c0_i32_0 : i32, i32
  }
}

</mosaic_0001>

<llo_original>
// kernel: tpu_custom_call.1
$region0: #{tpu_custom_call.1}
  #allocation0 [shape = 'u32[]', space=smem, size = 0x4, offset = 0x4, fixed_abs, tag = 'smem constant byte address 0x4 - core index']
  #allocation1 [shape = 'u32[144,128]{1,0:T(1,128)}', space=vmem, size = 0x12000, scoped, tag = 'internal scratch']
  #allocation2 [shape = 'f32[1,1]{1,0:T(1,128)S(1)}', space=vmem, size = 0x200, scoped, tag = 'scoped memory for tpu_custom_call.1']
  %s0 = inlined_call_operand.hbm [shape: f32[8,128], index: 0, kind: input, shape index: {}]
  %s1 = inlined_call_operand.hbm [shape: f32[8,128], index: 1, kind: input, shape index: {}]
  %s2 = inlined_call_operand.hbm [shape: f32[128,128], index: 2, kind: input, shape index: {}]
  %s3 = inlined_call_operand.vmem [shape: f32[8,16], index: 3, kind: input, shape index: {}]
  %s4 = inlined_call_operand.hbm [shape: bf16[128,384], index: 4, kind: input, shape index: {}]
  %s5 = inlined_call_operand.hbm [shape: bf16[128,384], index: 5, kind: input, shape index: {}]
  %s6 = inlined_call_operand.vmem [shape: f32[1,384], index: 6, kind: input, shape index: {}]
  %s7 = inlined_call_operand.vmem [shape: f32[1,384], index: 7, kind: input, shape index: {}]
  %s8 = inlined_call_operand.hbm [shape: bf16[128,128], index: 8, kind: input, shape index: {}]
  %s9 = inlined_call_operand.hbm [shape: bf16[128,128], index: 9, kind: input, shape index: {}]
  %s10 = inlined_call_operand.vmem [shape: f32[1,128], index: 10, kind: input, shape index: {}]
  %s11 = inlined_call_operand.vmem [shape: f32[1,128], index: 11, kind: input, shape index: {}]
  %s12 = inlined_call_operand.vmem [shape: f32[1,384], index: 12, kind: input, shape index: {}]
  %s13 = inlined_call_operand.<no memory space> [shape: f32[1,1], index: 13, kind: input, shape index: {}]
  %s14 = inlined_call_operand.hbm [shape: f32[8,128], index: 14, kind: output, shape index: {0}]
  %s15 = inlined_call_operand.hbm [shape: bf16[8,256], index: 15, kind: output, shape index: {1}]
  %s16 = inlined_call_operand.vmem [shape: f32[8,1], index: 16, kind: output, shape index: {2}]
  %s17 = inlined_call_operand.hbm [shape: f32[8,16], index: 17, kind: output, shape index: {3}]
  %s18 = inlined_call_operand.hbm [shape: f32[8,16], index: 18, kind: output, shape index: {4}]
  %19 = xla_tuple %s14, %s15, %s16, %s17, %s18
  %s20 = sld [smem:[#allocation0]]
  $region126: #{tpu_custom_call.1} parent=0
    _
  %s22 = ssub.s32 1, %s20
  %s23 = scalar_select 0, %s22, %s20
  %v24 = vstv %s13
  %25 = vst [vmem:[#allocation2] sm:$0x1] %v24
  $region1: #{tpu_custom_call.1} parent=0
    #allocation3 [shape = 'u8[4096]{0}', space=vmem, size = 0x1000, scoped, tag = 'input window, operand 0, single buffered']
    #allocation4 [shape = 's32[1]{0}', space=sflag, size = 0x4, scoped, tag = 'scoped memory for tpu_custom_call.1']
    #allocation5 [shape = 's32[1]{0}', space=sflag, size = 0x4, scoped, tag = 'scoped memory for tpu_custom_call.1']
    #allocation6 [shape = 'u8[4096]{0}', space=vmem, size = 0x1000, scoped, tag = 'input window, operand 1, single buffered']
    #allocation7 [shape = 's32[1]{0}', space=sflag, size = 0x4, scoped, tag = 'scoped memory for tpu_custom_call.1']
    #allocation8 [shape = 'u8[65536]{0}', space=vmem, size = 0x10000, scoped, tag = 'input window, operand 2, single buffered']
    #allocation9 [shape = 'u8[98304]{0}', space=vmem, size = 0x18000, scoped, tag = 'input window, operand 4, single buffered']
    #allocation10 [shape = 's32[1]{0}', space=sflag, size = 0x4, scoped, tag = 'scoped memory for tpu_custom_call.1']
    #allocation11 [shape = 'u8[98304]{0}', space=vmem, size = 0x18000, scoped, tag = 'input window, operand 5, single buffered']
    #allocation12 [shape = 'u8[32768]{0}', space=vmem, size = 0x8000, scoped, tag = 'input window, operand 8, single buffered']
    #allocation13 [shape = 's32[1]{0}', space=sflag, size = 0x4, scoped, tag = 'scoped memory for tpu_custom_call.1']
    #allocation14 [shape = 'u8[32768]{0}', space=vmem, size = 0x8000, scoped, tag = 'input window, operand 9, single buffered']
    #allocation15 [shape = 'u8[4096]{0}', space=vmem, size = 0x1000, scoped, tag = 'output window, operand 0, single buffered']
    #allocation16 [shape = 'u8[4096]{0}', space=vmem, size = 0x1000, scoped, tag = 'output window, operand 1, single buffered']
    #allocation17 [shape = 's32[1]{0}', space=sflag, size = 0x4, scoped, tag = 'scoped memory for tpu_custom_call.1']
    #allocation18 [shape = 'u8[4096]{0}', space=vmem, size = 0x1000, scoped, tag = 'output window, operand 3, single buffered']
    #allocation19 [shape = 'u8[4096]{0}', space=vmem, size = 0x1000, scoped, tag = 'output window, operand 4, single buffered']
    #allocation20 [shape = 's32[1]{0}', space=sflag, size = 0x4, scoped, tag = 'scoped memory for tpu_custom_call.1']
    %26 = vsyncpa [#allocation4], 0
    %27 = vsyncpa [#allocation7], 0
    %28 = vsyncpa [#allocation10], 0
    %29 = vsyncpa [#allocation13], 0
    %30 = vsyncpa [#allocation5], 0
    %31 = vsyncpa [#allocation17], 0
    %32 = vsyncpa [#allocation20], 0
    // Predicated region
    $region2: #{tpu_custom_call.1} parent=1 // pred_check
      _
    $region3: #{tpu_custom_call.1} parent=1 // pred_check_branch
      %34 = sbr.rel (0) target = $region5
    $region4: #{tpu_custom_call.1} parent=1 // pred_region
      %s36 = ssub.s32 128, 128
      %37 = vsyncadd [#allocation4], %s36
      %s39 = sshll.u32 [#allocation3], 4
      %s40 = int_to_ptr.vmem [resolvable:$true] %s39
      %42 = dma.hbm_to_vmem [thread:$0]  %s0, 128, %s40, [#allocation4]
    $region5: #{tpu_custom_call.1} parent=1 // pred_fallthru
      _
    // Predicated region
    $region6: #{tpu_custom_call.1} parent=1 // pred_check
      _
    $region7: #{tpu_custom_call.1} parent=1 // pred_check_branch
      %44 = sbr.rel (0) target = $region9
    $region8: #{tpu_custom_call.1} parent=1 // pred_region
      %s46 = ssub.s32 128, 128
      %47 = vsyncadd [#allocation7], %s46
      %s49 = sshll.u32 [#allocation6], 4
      %s50 = int_to_ptr.vmem [resolvable:$true] %s49
      %52 = dma.hbm_to_vmem [thread:$0]  %s1, 128, %s50, [#allocation7]
    $region9: #{tpu_custom_call.1} parent=1 // pred_fallthru
      _
    // Predicated region
    $region10: #{tpu_custom_call.1} parent=1 // pred_check
      _
    $region11: #{tpu_custom_call.1} parent=1 // pred_check_branch
      %54 = sbr.rel (0) target = $region13
    $region12: #{tpu_custom_call.1} parent=1 // pred_region
      %s56 = ssub.s32 2048, 2048
      %57 = vsyncadd [#allocation7], %s56
      %s58 = sshll.u32 [#allocation8], 4
      %s59 = int_to_ptr.vmem [resolvable:$true] %s58
      %64 = dma.hbm_to_vmem [thread:$0]  %s2, 2048, %s59, [#allocation7], 128, 128, 8
    $region13: #{tpu_custom_call.1} parent=1 // pred_fallthru
      _
    // Predicated region
    $region14: #{tpu_custom_call.1} parent=1 // pred_check
      _
    $region15: #{tpu_custom_call.1} parent=1 // pred_check_branch
      %66 = sbr.rel (0) target = $region17
    $region16: #{tpu_custom_call.1} parent=1 // pred_region
      _
    $region17: #{tpu_custom_call.1} parent=1 // pred_fallthru
      _
    // Predicated region
    $region18: #{tpu_custom_call.1} parent=1 // pred_check
      _
    $region19: #{tpu_custom_call.1} parent=1 // pred_check_branch
      %68 = sbr.rel (0) target = $region21
    $region20: #{tpu_custom_call.1} parent=1 // pred_region
      %s70 = ssub.s32 3072, 3072
      %71 = vsyncadd [#allocation10], %s70
      %s72 = sshll.u32 [#allocation9], 4
      %s73 = int_to_ptr.vmem [resolvable:$true] %s72
      %78 = dma.hbm_to_vmem [thread:$0]  %s4, 3072, %s73, [#allocation10], 192, 192, 12
    $region21: #{tpu_custom_call.1} parent=1 // pred_fallthru
      _
    // Predicated region
    $region22: #{tpu_custom_call.1} parent=1 // pred_check
      _
    $region23: #{tpu_custom_call.1} parent=1 // pred_check_branch
      %80 = sbr.rel (0) target = $region25
    $region24: #{tpu_custom_call.1} parent=1 // pred_region
      %s82 = ssub.s32 3072, 3072
      %83 = vsyncadd [#allocation10], %s82
      %s84 = sshll.u32 [#allocation11], 4
      %s85 = int_to_ptr.vmem [resolvable:$true] %s84
      %90 = dma.hbm_to_vmem [thread:$0]  %s5, 3072, %s85, [#allocation10], 192, 192, 12
    $region25: #{tpu_custom_call.1} parent=1 // pred_fallthru
      _
    // Predicated region
    $region26: #{tpu_custom_call.1} parent=1 // pred_check
      _
    $region27: #{tpu_custom_call.1} parent=1 // pred_check_branch
      %92 = sbr.rel (0) target = $region29
    $region28: #{tpu_custom_call.1} parent=1 // pred_region
      _
    $region29: #{tpu_custom_call.1} parent=1 // pred_fallthru
      _
    // Predicated region
    $region30: #{tpu_custom_call.1} parent=1 // pred_check
      _
    $region31: #{tpu_custom_call.1} parent=1 // pred_check_branch
      %94 = sbr.rel (0) target = $region33
    $region32: #{tpu_custom_call.1} parent=1 // pred_region
      _
    $region33: #{tpu_custom_call.1} parent=1 // pred_fallthru
      _
    // Predicated region
    $region34: #{tpu_custom_call.1} parent=1 // pred_check
      _
    $region35: #{tpu_custom_call.1} parent=1 // pred_check_branch
      %96 = sbr.rel (0) target = $region37
    $region36: #{tpu_custom_call.1} parent=1 // pred_region
      %s98 = ssub.s32 1024, 1024
      %99 = vsyncadd [#allocation13], %s98
      %s100 = sshll.u32 [#allocation12], 4
      %s101 = int_to_ptr.vmem [resolvable:$true] %s100
      %106 = dma.hbm_to_vmem [thread:$0]  %s8, 1024, %s101, [#allocation13], 64, 64, 4
    $region37: #{tpu_custom_call.1} parent=1 // pred_fallthru
      _
    // Predicated region
    $region38: #{tpu_custom_call.1} parent=1 // pred_check
      _
    $region39: #{tpu_custom_call.1} parent=1 // pred_check_branch
      %108 = sbr.rel (0) target = $region41
    $region40: #{tpu_custom_call.1} parent=1 // pred_region
      %s110 = ssub.s32 1024, 1024
      %111 = vsyncadd [#allocation13], %s110
      %s112 = sshll.u32 [#allocation14], 4
      %s113 = int_to_ptr.vmem [resolvable:$true] %s112
      %118 = dma.hbm_to_vmem [thread:$0]  %s9, 1024, %s113, [#allocation13], 64, 64, 4
    $region41: #{tpu_custom_call.1} parent=1 // pred_fallthru
      _
    // Predicated region
    $region42: #{tpu_custom_call.1} parent=1 // pred_check
      _
    $region43: #{tpu_custom_call.1} parent=1 // pred_check_branch
      %120 = sbr.rel (0) target = $region45
    $region44: #{tpu_custom_call.1} parent=1 // pred_region
      _
    $region45: #{tpu_custom_call.1} parent=1 // pred_fallthru
      _
    // Predicated region
    $region46: #{tpu_custom_call.1} parent=1 // pred_check
      _
    $region47: #{tpu_custom_call.1} parent=1 // pred_check_branch
      %122 = sbr.rel (0) target = $region49
    $region48: #{tpu_custom_call.1} parent=1 // pred_region
      _
    $region49: #{tpu_custom_call.1} parent=1 // pred_fallthru
      _
    // Predicated region
    $region50: #{tpu_custom_call.1} parent=1 // pred_check
      _
    $region51: #{tpu_custom_call.1} parent=1 // pred_check_branch
      %124 = sbr.rel (0) target = $region53
    $region52: #{tpu_custom_call.1} parent=1 // pred_region
      _
    $region53: #{tpu_custom_call.1} parent=1 // pred_fallthru
      _
    // Predicated region
    $region54: #{tpu_custom_call.1} parent=1 // pred_check
      _
    $region55: #{tpu_custom_call.1} parent=1 // pred_check_branch
      %126 = sbr.rel (0) target = $region57
    $region56: #{tpu_custom_call.1} parent=1 // pred_region
      _
    $region57: #{tpu_custom_call.1} parent=1 // pred_fallthru
      _
    // Predicated region
    $region58: #{tpu_custom_call.1} parent=1 // pred_check
      _
    $region59: #{tpu_custom_call.1} parent=1 // pred_check_branch
      %128 = sbr.rel (0) target = $region61
    $region60: #{tpu_custom_call.1} parent=1 // pred_region
      %129 = dma.done [#allocation4], 128
    $region61: #{tpu_custom_call.1} parent=1 // pred_fallthru
      _
    // Predicated region
    $region62: #{tpu_custom_call.1} parent=1 // pred_check
      _
    $region63: #{tpu_custom_call.1} parent=1 // pred_check_branch
      %131 = sbr.rel (0) target = $region65
    $region64: #{tpu_custom_call.1} parent=1 // pred_region
      %132 = dma.done [#allocation7], 128
    $region65: #{tpu_custom_call.1} parent=1 // pred_fallthru
      _
    // Predicated region
    $region66: #{tpu_custom_call.1} parent=1 // pred_check
      _
    $region67: #{tpu_custom_call.1} parent=1 // pred_check_branch
      %134 = sbr.rel (0) target = $region69
    $region68: #{tpu_custom_call.1} parent=1 // pred_region
      %135 = dma.done [#allocation7], 2048
    $region69: #{tpu_custom_call.1} parent=1 // pred_fallthru
      _
    // Predicated region
    $region70: #{tpu_custom_call.1} parent=1 // pred_check
      _
    $region71: #{tpu_custom_call.1} parent=1 // pred_check_branch
      %137 = sbr.rel (0) target = $region73
    $region72: #{tpu_custom_call.1} parent=1 // pred_region
      %138 = dma.done [#allocation10], 3072
    $region73: #{tpu_custom_call.1} parent=1 // pred_fallthru
      _
    // Predicated region
    $region74: #{tpu_custom_call.1} parent=1 // pred_check
      _
    $region75: #{tpu_custom_call.1} parent=1 // pred_check_branch
      %140 = sbr.rel (0) target = $region77
    $region76: #{tpu_custom_call.1} parent=1 // pred_region
      %141 = dma.done [#allocation10], 3072
    $region77: #{tpu_custom_call.1} parent=1 // pred_fallthru
      _
    // Predicated region
    $region78: #{tpu_custom_call.1} parent=1 // pred_check
      _
    $region79: #{tpu_custom_call.1} parent=1 // pred_check_branch
      %143 = sbr.rel (0) target = $region81
    $region80: #{tpu_custom_call.1} parent=1 // pred_region
      %144 = dma.done [#allocation13], 1024
    $region81: #{tpu_custom_call.1} parent=1 // pred_fallthru
      _
    // Predicated region
    $region82: #{tpu_custom_call.1} parent=1 // pred_check
      _
    $region83: #{tpu_custom_call.1} parent=1 // pred_check_branch
      %146 = sbr.rel (0) target = $region85
    $region84: #{tpu_custom_call.1} parent=1 // pred_region
      %147 = dma.done [#allocation13], 1024
    $region85: #{tpu_custom_call.1} parent=1 // pred_fallthru
      _
    %v149 = vld [vmem:[#allocation3] sm:$0xff]
    %v150 = vld [vmem:[#allocation6] sm:$0xff]
    %v151 = vpack.c.bf16 %v149, %v149
    %v152 = vld [vmem:[#allocation9] sm:$0xff]
    %v153 = vld [vmem:[#allocation9 + $0x8] sm:$0xf]
    %v154 = vld [vmem:[#allocation9 + $0xc] sm:$0xff]
    %v155 = vld [vmem:[#allocation9 + $0x14] sm:$0xf]
    %v156 = vld [vmem:[#allocation9 + $0x18] sm:$0xff]
    %v157 = vld [vmem:[#allocation9 + $0x20] sm:$0xf]
    %v158 = vld [vmem:[#allocation9 + $0x24] sm:$0xff]
    %v159 = vld [vmem:[#allocation9 + $0x2c] sm:$0xf]
    %v160 = vld [vmem:[#allocation9 + $0x30] sm:$0xff]
    %v161 = vld [vmem:[#allocation9 + $0x38] sm:$0xf]
    %v162 = vld [vmem:[#allocation9 + $0x3c] sm:$0xff]
    %v163 = vld [vmem:[#allocation9 + $0x44] sm:$0xf]
    %v164 = vld [vmem:[#allocation9 + $0x48] sm:$0xff]
    %v165 = vld [vmem:[#allocation9 + $0x50] sm:$0xf]
    %v166 = vld [vmem:[#allocation9 + $0x54] sm:$0xff]
    %v167 = vld [vmem:[#allocation9 + $0x5c] sm:$0xf]
    %v168 = vld [vmem:[#allocation9 + $0x60] sm:$0xff]
    %v169 = vld [vmem:[#allocation9 + $0x68] sm:$0xf]
    %v170 = vld [vmem:[#allocation9 + $0x6c] sm:$0xff]
    %v171 = vld [vmem:[#allocation9 + $0x74] sm:$0xf]
    %v172 = vld [vmem:[#allocation9 + $0x78] sm:$0xff]
    %v173 = vld [vmem:[#allocation9 + $0x80] sm:$0xf]
    %v174 = vld [vmem:[#allocation9 + $0x84] sm:$0xff]
    %v175 = vld [vmem:[#allocation9 + $0x8c] sm:$0xf]
    %v176 = vld [vmem:[#allocation9 + $0x90] sm:$0xff]
    %v177 = vld [vmem:[#allocation9 + $0x98] sm:$0xf]
    %v178 = vld [vmem:[#allocation9 + $0x9c] sm:$0xff]
    %v179 = vld [vmem:[#allocation9 + $0xa4] sm:$0xf]
    %v180 = vld [vmem:[#allocation9 + $0xa8] sm:$0xff]
    %v181 = vld [vmem:[#allocation9 + $0xb0] sm:$0xf]
    %v182 = vld [vmem:[#allocation9 + $0xb4] sm:$0xff]
    %v183 = vld [vmem:[#allocation9 + $0xbc] sm:$0xf]
    %v184 = vld [vmem:[%s6] sm:$0x7]
    %v186 = vlaneseq
    %v187 = vshrl.u32 %v186, 7
    %v188 = vsub.s32 0, %v187
    %v189 = vrot.slane %v184, %v188
    %v190 = vlaneseq
    %v191 = vshrl.u32 %v190, 7
    %v192 = vsub.s32 1, %v191
    %v193 = vrot.slane %v184, %v192
    %v194 = vlaneseq
    %v195 = vshrl.u32 %v194, 7
    %v196 = vsub.s32 2, %v195
    %v197 = vrot.slane %v184, %v196
    %v233 = vunpack.c.l.b16 %v152
    %v234 = vunpack.c.h.b16 %v152
    %v235 = vunpack.c.l.b16 %v153
    %v236 = vunpack.c.l.b16 %v154
    %v237 = vunpack.c.h.b16 %v154
    %v238 = vunpack.c.l.b16 %v155
    %v239 = vunpack.c.l.b16 %v156
    %v240 = vunpack.c.h.b16 %v156
    %v241 = vunpack.c.l.b16 %v157
    %v242 = vunpack.c.l.b16 %v158
    %v243 = vunpack.c.h.b16 %v158
    %v244 = vunpack.c.l.b16 %v159
    %v245 = vunpack.c.l.b16 %v160
    %v246 = vunpack.c.h.b16 %v160
    %v247 = vunpack.c.l.b16 %v161
    %v248 = vunpack.c.l.b16 %v162
    %v249 = vunpack.c.h.b16 %v162
    %v250 = vunpack.c.l.b16 %v163
    %v251 = vunpack.c.l.b16 %v164
    %v252 = vunpack.c.h.b16 %v164
    %v253 = vunpack.c.l.b16 %v165
    %v254 = vunpack.c.l.b16 %v166
    %v255 = vunpack.c.h.b16 %v166
    %v256 = vunpack.c.l.b16 %v167
    %v257 = vunpack.c.l.b16 %v168
    %v258 = vunpack.c.h.b16 %v168
    %v259 = vunpack.c.l.b16 %v169
    %v260 = vunpack.c.l.b16 %v170
    %v261 = vunpack.c.h.b16 %v170
    %v262 = vunpack.c.l.b16 %v171
    %v263 = vunpack.c.l.b16 %v172
    %v264 = vunpack.c.h.b16 %v172
    %v265 = vunpack.c.l.b16 %v173
    %v266 = vunpack.c.l.b16 %v174
    %v267 = vunpack.c.h.b16 %v174
    %v268 = vunpack.c.l.b16 %v175
    %v269 = vunpack.c.l.b16 %v176
    %v270 = vunpack.c.h.b16 %v176
    %v271 = vunpack.c.l.b16 %v177
    %v272 = vunpack.c.l.b16 %v178
    %v273 = vunpack.c.h.b16 %v178
    %v274 = vunpack.c.l.b16 %v179
    %v275 = vunpack.c.l.b16 %v180
    %v276 = vunpack.c.h.b16 %v180
    %v277 = vunpack.c.l.b16 %v181
    %v278 = vunpack.c.l.b16 %v182
    %v279 = vunpack.c.h.b16 %v182
    %v280 = vunpack.c.l.b16 %v183
    %v281 = vpack.c.b16 %v236, %v233
    %v282 = vpack.c.b16 %v237, %v234
    %v283 = vpack.c.b16 %v238, %v235
    %v284 = vpack.c.b16 %v242, %v239
    %v285 = vpack.c.b16 %v243, %v240
    %v286 = vpack.c.b16 %v244, %v241
    %v287 = vpack.c.b16 %v248, %v245
    %v288 = vpack.c.b16 %v249, %v246
    %v289 = vpack.c.b16 %v250, %v247
    %v290 = vpack.c.b16 %v254, %v251
    %v291 = vpack.c.b16 %v255, %v252
    %v292 = vpack.c.b16 %v256, %v253
    %v293 = vpack.c.b16 %v260, %v257
    %v294 = vpack.c.b16 %v261, %v258
    %v295 = vpack.c.b16 %v262, %v259
    %v296 = vpack.c.b16 %v266, %v263
    %v297 = vpack.c.b16 %v267, %v264
    %v298 = vpack.c.b16 %v268, %v265
    %v299 = vpack.c.b16 %v272, %v269
    %v300 = vpack.c.b16 %v273, %v270
    %v301 = vpack.c.b16 %v274, %v271
    %v302 = vpack.c.b16 %v278, %v275
    %v303 = vpack.c.b16 %v279, %v276
    %v304 = vpack.c.b16 %v280, %v277
    %329 = vmatprep.subr.bf16.mxu0 %v282
    %330 = vmatpush1.bf16.msra.mxu0 %v281
    %331 = vmatprep.subr.bf16.mxu0 %v285
    %332 = vmatpush1.bf16.msra.mxu0 %v284
    %333 = vmatprep.subr.bf16.mxu0 %v288
    %334 = vmatpush1.bf16.msra.mxu0 %v287
    %335 = vmatprep.subr.bf16.mxu0 %v291
    %336 = vmatpush1.bf16.msra.mxu0 %v290
    %337 = vmatprep.subr.bf16.mxu0 %v294
    %338 = vmatpush1.bf16.msra.mxu0 %v293
    %339 = vmatprep.subr.bf16.mxu0 %v297
    %340 = vmatpush1.bf16.msra.mxu0 %v296
    %341 = vmatprep.subr.bf16.mxu0 %v300
    %342 = vmatpush1.bf16.msra.mxu0 %v299
    %343 = vmatprep.subr.bf16.mxu0 %v303
    %344 = vmatpush1.bf16.msra.mxu0 %v302
    %345 = vmatprep.subr.bf16.mxu0 0
    %346 = vmatpush1.bf16.msra.mxu0 0
    %347 = vmatprep.subr.bf16.mxu0 0
    %348 = vmatpush1.bf16.msra.mxu0 0
    %349 = vmatprep.subr.bf16.mxu0 0
    %350 = vmatpush1.bf16.msra.mxu0 0
    %351 = vmatprep.subr.bf16.mxu0 0
    %352 = vmatpush1.bf16.msra.mxu0 0
    %353 = vmatprep.subr.bf16.mxu0 0
    %354 = vmatpush1.bf16.msra.mxu0 0
    %355 = vmatprep.subr.bf16.mxu0 0
    %356 = vmatpush1.bf16.msra.mxu0 0
    %357 = vmatprep.subr.bf16.mxu0 0
    %358 = vmatpush1.bf16.msra.mxu0 0
    %359 = vmatprep.subr.bf16.mxu0 0
    %360 = vmatpush1.bf16.msra.mxu0 0
    %361 = vmatprep.mubr.bf16.mxu0 0
    %362 = vmatmul.mubr.bf16.gmra.mrb[0].mxu0 %v151
    %v363 = vpop.f32.mrb[0].mxu0
    %v364 = vadd.f32 %v189, %v363
    %v365 = vpop.f32.mrb[0].mxu0
    %v366 = vadd.f32 %v193, %v365
    %v367 = vpop.f32.mrb[0].mxu0
    %v368 = vpop.f32.mrb[0].mxu0
    %369 = vdwg.mxu0
    %370 = vmatprep.subr.bf16.mxu0 0
    %371 = vmatpush1.bf16.msra.mxu0 %v283
    %372 = vmatprep.subr.bf16.mxu0 0
    %373 = vmatpush1.bf16.msra.mxu0 %v286
    %374 = vmatprep.subr.bf16.mxu0 0
    %375 = vmatpush1.bf16.msra.mxu0 %v289
    %376 = vmatprep.subr.bf16.mxu0 0
    %377 = vmatpush1.bf16.msra.mxu0 %v292
    %378 = vmatprep.subr.bf16.mxu0 0
    %379 = vmatpush1.bf16.msra.mxu0 %v295
    %380 = vmatprep.subr.bf16.mxu0 0
    %381 = vmatpush1.bf16.msra.mxu0 %v298
    %382 = vmatprep.subr.bf16.mxu0 0
    %383 = vmatpush1.bf16.msra.mxu0 %v301
    %384 = vmatprep.subr.bf16.mxu0 0
    %385 = vmatpush1.bf16.msra.mxu0 %v304
    %386 = vmatprep.subr.bf16.mxu0 0
    %387 = vmatpush1.bf16.msra.mxu0 0
    %388 = vmatprep.subr.bf16.mxu0 0
    %389 = vmatpush1.bf16.msra.mxu0 0
    %390 = vmatprep.subr.bf16.mxu0 0
    %391 = vmatpush1.bf16.msra.mxu0 0
    %392 = vmatprep.subr.bf16.mxu0 0
    %393 = vmatpush1.bf16.msra.mxu0 0
    %394 = vmatprep.subr.bf16.mxu0 0
    %395 = vmatpush1.bf16.msra.mxu0 0
    %396 = vmatprep.subr.bf16.mxu0 0
    %397 = vmatpush1.bf16.msra.mxu0 0
    %398 = vmatprep.subr.bf16.mxu0 0
    %399 = vmatpush1.bf16.msra.mxu0 0
    %400 = vmatprep.subr.bf16.mxu0 0
    %401 = vmatpush1.bf16.msra.mxu0 0
    %402 = vmatprep.mubr.bf16.mxu0 0
    %403 = vmatmul.mubr.bf16.gmra.mrb[0].mxu0 %v151
    %v404 = vpop.f32.mrb[0].mxu0
    %v405 = vadd.f32 %v197, %v404
    %v406 = vpop.f32.mrb[0].mxu0
    %v407 = vpop.f32.mrb[0].mxu0
    %v408 = vpop.f32.mrb[0].mxu0
    %409 = vdwg.mxu0
    %v410 = vpack.c.bf16 %v150, %v150
    %v411 = vld [vmem:[#allocation11] sm:$0xff]
    %v412 = vld [vmem:[#allocation11 + $0x8] sm:$0xf]
    %v413 = vld [vmem:[#allocation11 + $0xc] sm:$0xff]
    %v414 = vld [vmem:[#allocation11 + $0x14] sm:$0xf]
    %v415 = vld [vmem:[#allocation11 + $0x18] sm:$0xff]
    %v416 = vld [vmem:[#allocation11 + $0x20] sm:$0xf]
    %v417 = vld [vmem:[#allocation11 + $0x24] sm:$0xff]
    %v418 = vld [vmem:[#allocation11 + $0x2c] sm:$0xf]
    %v419 = vld [vmem:[#allocation11 + $0x30] sm:$0xff]
    %v420 = vld [vmem:[#allocation11 + $0x38] sm:$0xf]
    %v421 = vld [vmem:[#allocation11 + $0x3c] sm:$0xff]
    %v422 = vld [vmem:[#allocation11 + $0x44] sm:$0xf]
    %v423 = vld [vmem:[#allocation11 + $0x48] sm:$0xff]
    %v424 = vld [vmem:[#allocation11 + $0x50] sm:$0xf]
    %v425 = vld [vmem:[#allocation11 + $0x54] sm:$0xff]
    %v426 = vld [vmem:[#allocation11 + $0x5c] sm:$0xf]
    %v427 = vld [vmem:[#allocation11 + $0x60] sm:$0xff]
    %v428 = vld [vmem:[#allocation11 + $0x68] sm:$0xf]
    %v429 = vld [vmem:[#allocation11 + $0x6c] sm:$0xff]
    %v430 = vld [vmem:[#allocation11 + $0x74] sm:$0xf]
    %v431 = vld [vmem:[#allocation11 + $0x78] sm:$0xff]
    %v432 = vld [vmem:[#allocation11 + $0x80] sm:$0xf]
    %v433 = vld [vmem:[#allocation11 + $0x84] sm:$0xff]
    %v434 = vld [vmem:[#allocation11 + $0x8c] sm:$0xf]
    %v435 = vld [vmem:[#allocation11 + $0x90] sm:$0xff]
    %v436 = vld [vmem:[#allocation11 + $0x98] sm:$0xf]
    %v437 = vld [vmem:[#allocation11 + $0x9c] sm:$0xff]
    %v438 = vld [vmem:[#allocation11 + $0xa4] sm:$0xf]
    %v439 = vld [vmem:[#allocation11 + $0xa8] sm:$0xff]
    %v440 = vld [vmem:[#allocation11 + $0xb0] sm:$0xf]
    %v441 = vld [vmem:[#allocation11 + $0xb4] sm:$0xff]
    %v442 = vld [vmem:[#allocation11 + $0xbc] sm:$0xf]
    %v443 = vld [vmem:[%s7] sm:$0x7]
    %v445 = vlaneseq
    %v446 = vshrl.u32 %v445, 7
    %v447 = vsub.s32 0, %v446
    %v448 = vrot.slane %v443, %v447
    %v449 = vlaneseq
    %v450 = vshrl.u32 %v449, 7
    %v451 = vsub.s32 1, %v450
    %v452 = vrot.slane %v443, %v451
    %v453 = vlaneseq
    %v454 = vshrl.u32 %v453, 7
    %v455 = vsub.s32 2, %v454
    %v456 = vrot.slane %v443, %v455
    %v492 = vunpack.c.l.b16 %v411
    %v493 = vunpack.c.h.b16 %v411
    %v494 = vunpack.c.l.b16 %v412
    %v495 = vunpack.c.l.b16 %v413
    %v496 = vunpack.c.h.b16 %v413
    %v497 = vunpack.c.l.b16 %v414
    %v498 = vunpack.c.l.b16 %v415
    %v499 = vunpack.c.h.b16 %v415
    %v500 = vunpack.c.l.b16 %v416
    %v501 = vunpack.c.l.b16 %v417
    %v502 = vunpack.c.h.b16 %v417
    %v503 = vunpack.c.l.b16 %v418
    %v504 = vunpack.c.l.b16 %v419
    %v505 = vunpack.c.h.b16 %v419
    %v506 = vunpack.c.l.b16 %v420
    %v507 = vunpack.c.l.b16 %v421
    %v508 = vunpack.c.h.b16 %v421
    %v509 = vunpack.c.l.b16 %v422
    %v510 = vunpack.c.l.b16 %v423
    %v511 = vunpack.c.h.b16 %v423
    %v512 = vunpack.c.l.b16 %v424
    %v513 = vunpack.c.l.b16 %v425
    %v514 = vunpack.c.h.b16 %v425
    %v515 = vunpack.c.l.b16 %v426
    %v516 = vunpack.c.l.b16 %v427
    %v517 = vunpack.c.h.b16 %v427
    %v518 = vunpack.c.l.b16 %v428
    %v519 = vunpack.c.l.b16 %v429
    %v520 = vunpack.c.h.b16 %v429
    %v521 = vunpack.c.l.b16 %v430
    %v522 = vunpack.c.l.b16 %v431
    %v523 = vunpack.c.h.b16 %v431
    %v524 = vunpack.c.l.b16 %v432
    %v525 = vunpack.c.l.b16 %v433
    %v526 = vunpack.c.h.b16 %v433
    %v527 = vunpack.c.l.b16 %v434
    %v528 = vunpack.c.l.b16 %v435
    %v529 = vunpack.c.h.b16 %v435
    %v530 = vunpack.c.l.b16 %v436
    %v531 = vunpack.c.l.b16 %v437
    %v532 = vunpack.c.h.b16 %v437
    %v533 = vunpack.c.l.b16 %v438
    %v534 = vunpack.c.l.b16 %v439
    %v535 = vunpack.c.h.b16 %v439
    %v536 = vunpack.c.l.b16 %v440
    %v537 = vunpack.c.l.b16 %v441
    %v538 = vunpack.c.h.b16 %v441
    %v539 = vunpack.c.l.b16 %v442
    %v540 = vpack.c.b16 %v495, %v492
    %v541 = vpack.c.b16 %v496, %v493
    %v542 = vpack.c.b16 %v497, %v494
    %v543 = vpack.c.b16 %v501, %v498
    %v544 = vpack.c.b16 %v502, %v499
    %v545 = vpack.c.b16 %v503, %v500
    %v546 = vpack.c.b16 %v507, %v504
    %v547 = vpack.c.b16 %v508, %v505
    %v548 = vpack.c.b16 %v509, %v506
    %v549 = vpack.c.b16 %v513, %v510
    %v550 = vpack.c.b16 %v514, %v511
    %v551 = vpack.c.b16 %v515, %v512
    %v552 = vpack.c.b16 %v519, %v516
    %v553 = vpack.c.b16 %v520, %v517
    %v554 = vpack.c.b16 %v521, %v518
    %v555 = vpack.c.b16 %v525, %v522
    %v556 = vpack.c.b16 %v526, %v523
    %v557 = vpack.c.b16 %v527, %v524
    %v558 = vpack.c.b16 %v531, %v528
    %v559 = vpack.c.b16 %v532, %v529
    %v560 = vpack.c.b16 %v533, %v530
    %v561 = vpack.c.b16 %v537, %v534
    %v562 = vpack.c.b16 %v538, %v535
    %v563 = vpack.c.b16 %v539, %v536
    %588 = vmatprep.subr.bf16.mxu0 %v541
    %589 = vmatpush1.bf16.msra.mxu0 %v540
    %590 = vmatprep.subr.bf16.mxu0 %v544
    %591 = vmatpush1.bf16.msra.mxu0 %v543
    %592 = vmatprep.subr.bf16.mxu0 %v547
    %593 = vmatpush1.bf16.msra.mxu0 %v546
    %594 = vmatprep.subr.bf16.mxu0 %v550
    %595 = vmatpush1.bf16.msra.mxu0 %v549
    %596 = vmatprep.subr.bf16.mxu0 %v553
    %597 = vmatpush1.bf16.msra.mxu0 %v552
    %598 = vmatprep.subr.bf16.mxu0 %v556
    %599 = vmatpush1.bf16.msra.mxu0 %v555
    %600 = vmatprep.subr.bf16.mxu0 %v559
    %601 = vmatpush1.bf16.msra.mxu0 %v558
    %602 = vmatprep.subr.bf16.mxu0 %v562
    %603 = vmatpush1.bf16.msra.mxu0 %v561
    %604 = vmatprep.subr.bf16.mxu0 0
    %605 = vmatpush1.bf16.msra.mxu0 0
    %606 = vmatprep.subr.bf16.mxu0 0
    %607 = vmatpush1.bf16.msra.mxu0 0
    %608 = vmatprep.subr.bf16.mxu0 0
    %609 = vmatpush1.bf16.msra.mxu0 0
    %610 = vmatprep.subr.bf16.mxu0 0
    %611 = vmatpush1.bf16.msra.mxu0 0
    %612 = vmatprep.subr.bf16.mxu0 0
    %613 = vmatpush1.bf16.msra.mxu0 0
    %614 = vmatprep.subr.bf16.mxu0 0
    %615 = vmatpush1.bf16.msra.mxu0 0
    %616 = vmatprep.subr.bf16.mxu0 0
    %617 = vmatpush1.bf16.msra.mxu0 0
    %618 = vmatprep.subr.bf16.mxu0 0
    %619 = vmatpush1.bf16.msra.mxu0 0
    %620 = vmatprep.mubr.bf16.mxu0 0
    %621 = vmatmul.mubr.bf16.gmra.mrb[0].mxu0 %v410
    %v622 = vpop.f32.mrb[0].mxu0
    %v623 = vadd.f32 %v448, %v622
    %v624 = vpop.f32.mrb[0].mxu0
    %v625 = vadd.f32 %v452, %v624
    %v626 = vpop.f32.mrb[0].mxu0
    %v627 = vpop.f32.mrb[0].mxu0
    %628 = vdwg.mxu0
    %629 = vmatprep.subr.bf16.mxu0 0
    %630 = vmatpush1.bf16.msra.mxu0 %v542
    %631 = vmatprep.subr.bf16.mxu0 0
    %632 = vmatpush1.bf16.msra.mxu0 %v545
    %633 = vmatprep.subr.bf16.mxu0 0
    %634 = vmatpush1.bf16.msra.mxu0 %v548
    %635 = vmatprep.subr.bf16.mxu0 0
    %636 = vmatpush1.bf16.msra.mxu0 %v551
    %637 = vmatprep.subr.bf16.mxu0 0
    %638 = vmatpush1.bf16.msra.mxu0 %v554
    %639 = vmatprep.subr.bf16.mxu0 0
    %640 = vmatpush1.bf16.msra.mxu0 %v557
    %641 = vmatprep.subr.bf16.mxu0 0
    %642 = vmatpush1.bf16.msra.mxu0 %v560
    %643 = vmatprep.subr.bf16.mxu0 0
    %644 = vmatpush1.bf16.msra.mxu0 %v563
    %645 = vmatprep.subr.bf16.mxu0 0
    %646 = vmatpush1.bf16.msra.mxu0 0
    %647 = vmatprep.subr.bf16.mxu0 0
    %648 = vmatpush1.bf16.msra.mxu0 0
    %649 = vmatprep.subr.bf16.mxu0 0
    %650 = vmatpush1.bf16.msra.mxu0 0
    %651 = vmatprep.subr.bf16.mxu0 0
    %652 = vmatpush1.bf16.msra.mxu0 0
    %653 = vmatprep.subr.bf16.mxu0 0
    %654 = vmatpush1.bf16.msra.mxu0 0
    %655 = vmatprep.subr.bf16.mxu0 0
    %656 = vmatpush1.bf16.msra.mxu0 0
    %657 = vmatprep.subr.bf16.mxu0 0
    %658 = vmatpush1.bf16.msra.mxu0 0
    %659 = vmatprep.subr.bf16.mxu0 0
    %660 = vmatpush1.bf16.msra.mxu0 0
    %661 = vmatprep.mubr.bf16.mxu0 0
    %662 = vmatmul.mubr.bf16.gmra.mrb[0].mxu0 %v410
    %v663 = vpop.f32.mrb[0].mxu0
    %v664 = vadd.f32 %v456, %v663
    %v665 = vpop.f32.mrb[0].mxu0
    %v666 = vpop.f32.mrb[0].mxu0
    %v667 = vpop.f32.mrb[0].mxu0
    %668 = vdwg.mxu0
    %v669 = vadd.f32 %v364, %v623
    %v670 = vsub.f32 0.0, %v669
    %v671 = vmul.f32 %v670, 1.442695
    %v672 = vpow.pop %v671
    %v673 = vadd.f32 %v672, 1.0
    %v674 = vrcp.pop %v673
    %v675 = vadd.f32 %v366, %v625
    %v676 = vsub.f32 0.0, %v675
    %v677 = vmul.f32 %v676, 1.442695
    %v678 = vpow.pop %v677
    %v679 = vadd.f32 %v678, 1.0
    %v680 = vrcp.pop %v679
    %v681 = vmul.f32 %v674, %v664
    %v682 = vadd.f32 %v405, %v681
    %v683 = vtanh.pop %v682
    %v684 = vsub.f32 1.0, %v680
    %v685 = vmul.f32 %v684, %v683
    %v686 = vmul.f32 %v680, %v150
    %v687 = vadd.f32 %v685, %v686
    %688 = vst [vmem:[#allocation15] sm:$0xff] %v687
    %v689 = vld [vmem:[#allocation8] sm:$0xff]
    %v690 = vld [vmem:[#allocation8 + $0x8] sm:$0xff]
    %v691 = vld [vmem:[#allocation8 + $0x10] sm:$0xff]
    %v692 = vld [vmem:[#allocation8 + $0x18] sm:$0xff]
    %v693 = vld [vmem:[#allocation8 + $0x20] sm:$0xff]
    %v694 = vld [vmem:[#allocation8 + $0x28] sm:$0xff]
    %v695 = vld [vmem:[#allocation8 + $0x30] sm:$0xff]
    %v696 = vld [vmem:[#allocation8 + $0x38] sm:$0xff]
    %v697 = vld [vmem:[#allocation8 + $0x40] sm:$0xff]
    %v698 = vld [vmem:[#allocation8 + $0x48] sm:$0xff]
    %v699 = vld [vmem:[#allocation8 + $0x50] sm:$0xff]
    %v700 = vld [vmem:[#allocation8 + $0x58] sm:$0xff]
    %v701 = vld [vmem:[#allocation8 + $0x60] sm:$0xff]
    %v702 = vld [vmem:[#allocation8 + $0x68] sm:$0xff]
    %v703 = vld [vmem:[#allocation8 + $0x70] sm:$0xff]
    %v704 = vld [vmem:[#allocation8 + $0x78] sm:$0xff]
    %v705 = vpack.c.bf16 %v690, %v689
    %v706 = vpack.c.bf16 %v692, %v691
    %v707 = vpack.c.bf16 %v694, %v693
    %v708 = vpack.c.bf16 %v696, %v695
    %v709 = vpack.c.bf16 %v698, %v697
    %v710 = vpack.c.bf16 %v700, %v699
    %v711 = vpack.c.bf16 %v702, %v701
    %v712 = vpack.c.bf16 %v704, %v703
    %v713 = vld [vmem:[#allocation12] sm:$0xf]
    %v714 = vld [vmem:[#allocation12 + $0x4] sm:$0xf]
    %v715 = vld [vmem:[#allocation12 + $0x8] sm:$0xf]
    %v716 = vld [vmem:[#allocation12 + $0xc] sm:$0xf]
    %v717 = vld [vmem:[#allocation12 + $0x10] sm:$0xf]
    %v718 = vld [vmem:[#allocation12 + $0x14] sm:$0xf]
    %v719 = vld [vmem:[#allocation12 + $0x18] sm:$0xf]
    %v720 = vld [vmem:[#allocation12 + $0x1c] sm:$0xf]
    %v721 = vld [vmem:[#allocation12 + $0x20] sm:$0xf]
    %v722 = vld [vmem:[#allocation12 + $0x24] sm:$0xf]
    %v723 = vld [vmem:[#allocation12 + $0x28] sm:$0xf]
    %v724 = vld [vmem:[#allocation12 + $0x2c] sm:$0xf]
    %v725 = vld [vmem:[#allocation12 + $0x30] sm:$0xf]
    %v726 = vld [vmem:[#allocation12 + $0x34] sm:$0xf]
    %v727 = vld [vmem:[#allocation12 + $0x38] sm:$0xf]
    %v728 = vld [vmem:[#allocation12 + $0x3c] sm:$0xf]
    %v729 = vpack.c.bf16 %v687, %v687
    %v730 = vld [vmem:[#allocation14] sm:$0xf]
    %v731 = vld [vmem:[#allocation14 + $0x4] sm:$0xf]
    %v732 = vld [vmem:[#allocation14 + $0x8] sm:$0xf]
    %v733 = vld [vmem:[#allocation14 + $0xc] sm:$0xf]
    %v734 = vld [vmem:[#allocation14 + $0x10] sm:$0xf]
    %v735 = vld [vmem:[#allocation14 + $0x14] sm:$0xf]
    %v736 = vld [vmem:[#allocation14 + $0x18] sm:$0xf]
    %v737 = vld [vmem:[#allocation14 + $0x1c] sm:$0xf]
    %v738 = vld [vmem:[#allocation14 + $0x20] sm:$0xf]
    %v739 = vld [vmem:[#allocation14 + $0x24] sm:$0xf]
    %v740 = vld [vmem:[#allocation14 + $0x28] sm:$0xf]
    %v741 = vld [vmem:[#allocation14 + $0x2c] sm:$0xf]
    %v742 = vld [vmem:[#allocation14 + $0x30] sm:$0xf]
    %v743 = vld [vmem:[#allocation14 + $0x34] sm:$0xf]
    %v744 = vld [vmem:[#allocation14 + $0x38] sm:$0xf]
    %v745 = vld [vmem:[#allocation14 + $0x3c] sm:$0xf]
    %v746 = vld [vmem:[%s10] sm:$0x1]
    %v748 = vlaneseq
    %v749 = vshrl.u32 %v748, 7
    %v750 = vsub.s32 0, %v749
    %v751 = vrot.slane %v746, %v750
    %v769 = vunpack.c.l.b16 %v730
    %v770 = vunpack.c.l.b16 %v731
    %v771 = vunpack.c.l.b16 %v732
    %v772 = vunpack.c.l.b16 %v733
    %v773 = vunpack.c.l.b16 %v734
    %v774 = vunpack.c.l.b16 %v735
    %v775 = vunpack.c.l.b16 %v736
    %v776 = vunpack.c.l.b16 %v737
    %v777 = vunpack.c.l.b16 %v738
    %v778 = vunpack.c.l.b16 %v739
    %v779 = vunpack.c.l.b16 %v740
    %v780 = vunpack.c.l.b16 %v741
    %v781 = vunpack.c.l.b16 %v742
    %v782 = vunpack.c.l.b16 %v743
    %v783 = vunpack.c.l.b16 %v744
    %v784 = vunpack.c.l.b16 %v745
    %v785 = vpack.c.b16 %v770, %v769
    %v786 = vpack.c.b16 %v772, %v771
    %v787 = vpack.c.b16 %v774, %v773
    %v788 = vpack.c.b16 %v776, %v775
    %v789 = vpack.c.b16 %v778, %v777
    %v790 = vpack.c.b16 %v780, %v779
    %v791 = vpack.c.b16 %v782, %v781
    %v792 = vpack.c.b16 %v784, %v783
    %801 = vmatprep.subr.bf16.mxu0 0
    %802 = vmatpush1.bf16.msra.mxu0 %v785
    %803 = vmatprep.subr.bf16.mxu0 0
    %804 = vmatpush1.bf16.msra.mxu0 %v786
    %805 = vmatprep.subr.bf16.mxu0 0
    %806 = vmatpush1.bf16.msra.mxu0 %v787
    %807 = vmatprep.subr.bf16.mxu0 0
    %808 = vmatpush1.bf16.msra.mxu0 %v788
    %809 = vmatprep.subr.bf16.mxu0 0
    %810 = vmatpush1.bf16.msra.mxu0 %v789
    %811 = vmatprep.subr.bf16.mxu0 0
    %812 = vmatpush1.bf16.msra.mxu0 %v790
    %813 = vmatprep.subr.bf16.mxu0 0
    %814 = vmatpush1.bf16.msra.mxu0 %v791
    %815 = vmatprep.subr.bf16.mxu0 0
    %816 = vmatpush1.bf16.msra.mxu0 %v792
    %817 = vmatprep.subr.bf16.mxu0 0
    %818 = vmatpush1.bf16.msra.mxu0 0
    %819 = vmatprep.subr.bf16.mxu0 0
    %820 = vmatpush1.bf16.msra.mxu0 0
    %821 = vmatprep.subr.bf16.mxu0 0
    %822 = vmatpush1.bf16.msra.mxu0 0
    %823 = vmatprep.subr.bf16.mxu0 0
    %824 = vmatpush1.bf16.msra.mxu0 0
    %825 = vmatprep.subr.bf16.mxu0 0
    %826 = vmatpush1.bf16.msra.mxu0 0
    %827 = vmatprep.subr.bf16.mxu0 0
    %828 = vmatpush1.bf16.msra.mxu0 0
    %829 = vmatprep.subr.bf16.mxu0 0
    %830 = vmatpush1.bf16.msra.mxu0 0
    %831 = vmatprep.subr.bf16.mxu0 0
    %832 = vmatpush1.bf16.msra.mxu0 0
    %833 = vmatprep.mubr.bf16.mxu0 0
    %834 = vmatmul.mubr.bf16.gmra.mrb[0].mxu0 %v729
    %v835 = vpop.f32.mrb[0].mxu0
    %v836 = vadd.f32 %v751, %v835
    %v837 = vpop.f32.mrb[0].mxu0
    %v838 = vpop.f32.mrb[0].mxu0
    %v839 = vpop.f32.mrb[0].mxu0
    %840 = vdwg.mxu0
    %v841 = vlaneseq
    %v842 = vshrl.u32 %v841, 7
    %v843 = vadd.s32 %v842, 8
    %v844 = vadd.s32 %v842, 16
    %v845 = vadd.s32 %v842, 24
    %v846 = vadd.s32 %v842, 32
    %v847 = vadd.s32 %v842, 40
    %v848 = vadd.s32 %v842, 48
    %v849 = vadd.s32 %v842, 56
    %v850 = vadd.s32 %v842, 64
    %v851 = vadd.s32 %v842, 72
    %v852 = vadd.s32 %v842, 80
    %v853 = vadd.s32 %v842, 88
    %v854 = vadd.s32 %v842, 96
    %v855 = vadd.s32 %v842, 104
    %v856 = vadd.s32 %v842, 112
    %v857 = vadd.s32 %v842, 120
    %v858 = vlaneseq
    %v859 = vand.u32 %v858, 127
    %v860 = vmul.u32 %v859, 16
    %vm861 = vcmp.ge.s32.totalorder %v842, %v860
    %vm862 = vcmp.ge.s32.totalorder %v843, %v860
    %vm863 = vcmp.ge.s32.totalorder %v844, %v860
    %vm864 = vcmp.ge.s32.totalorder %v845, %v860
    %vm865 = vcmp.ge.s32.totalorder %v846, %v860
    %vm866 = vcmp.ge.s32.totalorder %v847, %v860
    %vm867 = vcmp.ge.s32.totalorder %v848, %v860
    %vm868 = vcmp.ge.s32.totalorder %v849, %v860
    %vm869 = vcmp.ge.s32.totalorder %v850, %v860
    %vm870 = vcmp.ge.s32.totalorder %v851, %v860
    %vm871 = vcmp.ge.s32.totalorder %v852, %v860
    %vm872 = vcmp.ge.s32.totalorder %v853, %v860
    %vm873 = vcmp.ge.s32.totalorder %v854, %v860
    %vm874 = vcmp.ge.s32.totalorder %v855, %v860
    %vm875 = vcmp.ge.s32.totalorder %v856, %v860
    %vm876 = vcmp.ge.s32.totalorder %v857, %v860
    %v877 = vadd.s32 %v859, 1
    %v878 = vmul.u32 %v877, 16
    %vm879 = vcmp.lt.s32.totalorder %v842, %v878
    %vm880 = vcmp.lt.s32.totalorder %v843, %v878
    %vm881 = vcmp.lt.s32.totalorder %v844, %v878
    %vm882 = vcmp.lt.s32.totalorder %v845, %v878
    %vm883 = vcmp.lt.s32.totalorder %v846, %v878
    %vm884 = vcmp.lt.s32.totalorder %v847, %v878
    %vm885 = vcmp.lt.s32.totalorder %v848, %v878
    %vm886 = vcmp.lt.s32.totalorder %v849, %v878
    %vm887 = vcmp.lt.s32.totalorder %v850, %v878
    %vm888 = vcmp.lt.s32.totalorder %v851, %v878
    %vm889 = vcmp.lt.s32.totalorder %v852, %v878
    %vm890 = vcmp.lt.s32.totalorder %v853, %v878
    %vm891 = vcmp.lt.s32.totalorder %v854, %v878
    %vm892 = vcmp.lt.s32.totalorder %v855, %v878
    %vm893 = vcmp.lt.s32.totalorder %v856, %v878
    %vm894 = vcmp.lt.s32.totalorder %v857, %v878
    %vm895 = vmand %vm861, %vm879
    %vm896 = vmand %vm862, %vm880
    %vm897 = vmand %vm863, %vm881
    %vm898 = vmand %vm864, %vm882
    %vm899 = vmand %vm865, %vm883
    %vm900 = vmand %vm866, %vm884
    %vm901 = vmand %vm867, %vm885
    %vm902 = vmand %vm868, %vm886
    %vm903 = vmand %vm869, %vm887
    %vm904 = vmand %vm870, %vm888
    %vm905 = vmand %vm871, %vm889
    %vm906 = vmand %vm872, %vm890
    %vm907 = vmand %vm873, %vm891
    %vm908 = vmand %vm874, %vm892
    %vm909 = vmand %vm875, %vm893
    %vm910 = vmand %vm876, %vm894
    %v911 = vsel %vm895, 1, 0
    %v912 = vsel %vm896, 1, 0
    %v913 = vsel %vm897, 1, 0
    %v914 = vsel %vm898, 1, 0
    %v915 = vsel %vm899, 1, 0
    %v916 = vsel %vm900, 1, 0
    %v917 = vsel %vm901, 1, 0
    %v918 = vsel %vm902, 1, 0
    %v919 = vsel %vm903, 1, 0
    %v920 = vsel %vm904, 1, 0
    %v921 = vsel %vm905, 1, 0
    %v922 = vsel %vm906, 1, 0
    %v923 = vsel %vm907, 1, 0
    %v924 = vsel %vm908, 1, 0
    %v925 = vsel %vm909, 1, 0
    %v926 = vsel %vm910, 1, 0
    %v927 = vcvt.s32.f32 %v911
    %v928 = vcvt.s32.f32 %v912
    %v929 = vcvt.s32.f32 %v913
    %v930 = vcvt.s32.f32 %v914
    %v931 = vcvt.s32.f32 %v915
    %v932 = vcvt.s32.f32 %v916
    %v933 = vcvt.s32.f32 %v917
    %v934 = vcvt.s32.f32 %v918
    %v935 = vcvt.s32.f32 %v919
    %v936 = vcvt.s32.f32 %v920
    %v937 = vcvt.s32.f32 %v921
    %v938 = vcvt.s32.f32 %v922
    %v939 = vcvt.s32.f32 %v923
    %v940 = vcvt.s32.f32 %v924
    %v941 = vcvt.s32.f32 %v925
    %v942 = vcvt.s32.f32 %v926
    %vm943 = vcmask 64512
    %v945 = vsel %vm943, %v927, 0
    %v948 = vsel %vm943, %v928, 0
    %v951 = vsel %vm943, %v929, 0
    %v954 = vsel %vm943, %v930, 0
    %v957 = vsel %vm943, %v931, 0
    %v960 = vsel %vm943, %v932, 0
    %v963 = vsel %vm943, %v933, 0
    %v966 = vsel %vm943, %v934, 0
    %v969 = vsel %vm943, %v935, 0
    %v972 = vsel %vm943, %v936, 0
    %v975 = vsel %vm943, %v937, 0
    %v978 = vsel %vm943, %v938, 0
    %v981 = vsel %vm943, %v939, 0
    %v984 = vsel %vm943, %v940, 0
    %v987 = vsel %vm943, %v941, 0
    %v990 = vsel %vm943, %v942, 0
    %992 = vmatprep.subr.mxu0 0.0
    %993 = vmatpush1.msra.mxu0 %v836
    %994 = vmatprep.subr.mxu0 0.0
    %995 = vmatpush1.msra.mxu0 0.0
    %996 = vmatprep.subr.mxu0 0.0
    %997 = vmatpush1.msra.mxu0 0.0
    %998 = vmatprep.subr.mxu0 0.0
    %999 = vmatpush1.msra.mxu0 0.0
    %1000 = vmatprep.subr.mxu0 0.0
    %1001 = vmatpush1.msra.mxu0 0.0
    %1002 = vmatprep.subr.mxu0 0.0
    %1003 = vmatpush1.msra.mxu0 0.0
    %1004 = vmatprep.subr.mxu0 0.0
    %1005 = vmatpush1.msra.mxu0 0.0
    %1006 = vmatprep.subr.mxu0 0.0
    %1007 = vmatpush1.msra.mxu0 0.0
    %1008 = vmatprep.subr.mxu0 0.0
    %1009 = vmatpush1.msra.mxu0 0.0
    %1010 = vmatprep.subr.mxu0 0.0
    %1011 = vmatpush1.msra.mxu0 0.0
    %1012 = vmatprep.subr.mxu0 0.0
    %1013 = vmatpush1.msra.mxu0 0.0
    %1014 = vmatprep.subr.mxu0 0.0
    %1015 = vmatpush1.msra.mxu0 0.0
    %1016 = vmatprep.subr.mxu0 0.0
    %1017 = vmatpush1.msra.mxu0 0.0
    %1018 = vmatprep.subr.mxu0 0.0
    %1019 = vmatpush1.msra.mxu0 0.0
    %1020 = vmatprep.subr.mxu0 0.0
    %1021 = vmatpush1.msra.mxu0 0.0
    %1022 = vmatprep.subr.mxu0 0.0
    %1023 = vmatpush1.msra.mxu0 0.0
    %1024 = vmatprep.subr.mxu0 0.0
    %1025 = vmatpush1.msra.mxu0 0.0
    %1026 = vmatprep.subr.mxu0 0.0
    %1027 = vmatpush1.msra.mxu0 0.0
    %1028 = vmatprep.subr.mxu0 0.0
    %1029 = vmatpush1.msra.mxu0 0.0
    %1030 = vmatprep.subr.mxu0 0.0
    %1031 = vmatpush1.msra.mxu0 0.0
    %1032 = vmatprep.subr.mxu0 0.0
    %1033 = vmatpush1.msra.mxu0 0.0
    %1034 = vmatprep.subr.mxu0 0.0
    %1035 = vmatpush1.msra.mxu0 0.0
    %1036 = vmatprep.subr.mxu0 0.0
    %1037 = vmatpush1.msra.mxu0 0.0
    %1038 = vmatprep.subr.mxu0 0.0
    %1039 = vmatpush1.msra.mxu0 0.0
    %1040 = vmatprep.subr.mxu0 0.0
    %1041 = vmatpush1.msra.mxu0 0.0
    %1042 = vmatprep.subr.mxu0 0.0
    %1043 = vmatpush1.msra.mxu0 0.0
    %1044 = vmatprep.subr.mxu0 0.0
    %1045 = vmatpush1.msra.mxu0 0.0
    %1046 = vmatprep.subr.mxu0 0.0
    %1047 = vmatpush1.msra.mxu0 0.0
    %1048 = vmatprep.subr.mxu0 0.0
    %1049 = vmatpush1.msra.mxu0 0.0
    %1050 = vmatprep.subr.mxu0 0.0
    %1051 = vmatpush1.msra.mxu0 0.0
    %1052 = vmatprep.subr.mxu0 0.0
    %1053 = vmatpush1.msra.mxu0 0.0
    %1054 = vmatprep.subr.mxu0 0.0
    %1055 = vmatpush1.msra.mxu0 0.0
    %1056 = vmatprep.mubr.f32.mxu0 0.0
    %1057 = vmatmul.mubr.f32.gmra.mrb[0].mxu0 %v945
    %v1058 = vpop.f32.mrb[0].mxu0
    %v1059 = vadd.f32 0.0, %v1058
    %v1060 = vpop.f32.mrb[0].mxu0
    %1061 = vmatprep.mubr.f32.mxu0 0.0
    %1062 = vmatmul.mubr.f32.gmra.mrb[0].mxu0 %v948
    %v1063 = vpop.f32.mrb[0].mxu0
    %v1064 = vadd.f32 0.0, %v1063
    %v1065 = vpop.f32.mrb[0].mxu0
    %1066 = vmatprep.mubr.f32.mxu0 0.0
    %1067 = vmatmul.mubr.f32.gmra.mrb[0].mxu0 %v951
    %v1068 = vpop.f32.mrb[0].mxu0
    %v1069 = vadd.f32 0.0, %v1068
    %v1070 = vpop.f32.mrb[0].mxu0
    %1071 = vmatprep.mubr.f32.mxu0 0.0
    %1072 = vmatmul.mubr.f32.gmra.mrb[0].mxu0 %v954
    %v1073 = vpop.f32.mrb[0].mxu0
    %v1074 = vadd.f32 0.0, %v1073
    %v1075 = vpop.f32.mrb[0].mxu0
    %1076 = vmatprep.mubr.f32.mxu0 0.0
    %1077 = vmatmul.mubr.f32.gmra.mrb[0].mxu0 %v957
    %v1078 = vpop.f32.mrb[0].mxu0
    %v1079 = vadd.f32 0.0, %v1078
    %v1080 = vpop.f32.mrb[0].mxu0
    %1081 = vmatprep.mubr.f32.mxu0 0.0
    %1082 = vmatmul.mubr.f32.gmra.mrb[0].mxu0 %v960
    %v1083 = vpop.f32.mrb[0].mxu0
    %v1084 = vadd.f32 0.0, %v1083
    %v1085 = vpop.f32.mrb[0].mxu0
    %1086 = vmatprep.mubr.f32.mxu0 0.0
    %1087 = vmatmul.mubr.f32.gmra.mrb[0].mxu0 %v963
    %v1088 = vpop.f32.mrb[0].mxu0
    %v1089 = vadd.f32 0.0, %v1088
    %v1090 = vpop.f32.mrb[0].mxu0
    %1091 = vmatprep.mubr.f32.mxu0 0.0
    %1092 = vmatmul.mubr.f32.gmra.mrb[0].mxu0 %v966
    %v1093 = vpop.f32.mrb[0].mxu0
    %v1094 = vadd.f32 0.0, %v1093
    %v1095 = vpop.f32.mrb[0].mxu0
    %1096 = vmatprep.mubr.f32.mxu0 0.0
    %1097 = vmatmul.mubr.f32.gmra.mrb[0].mxu0 %v969
    %v1098 = vpop.f32.mrb[0].mxu0
    %v1099 = vadd.f32 0.0, %v1098
    %v1100 = vpop.f32.mrb[0].mxu0
    %1101 = vmatprep.mubr.f32.mxu0 0.0
    %1102 = vmatmul.mubr.f32.gmra.mrb[0].mxu0 %v972
    %v1103 = vpop.f32.mrb[0].mxu0
    %v1104 = vadd.f32 0.0, %v1103
    %v1105 = vpop.f32.mrb[0].mxu0
    %1106 = vmatprep.mubr.f32.mxu0 0.0
    %1107 = vmatmul.mubr.f32.gmra.mrb[0].mxu0 %v975
    %v1108 = vpop.f32.mrb[0].mxu0
    %v1109 = vadd.f32 0.0, %v1108
    %v1110 = vpop.f32.mrb[0].mxu0
    %1111 = vmatprep.mubr.f32.mxu0 0.0
    %1112 = vmatmul.mubr.f32.gmra.mrb[0].mxu0 %v978
    %v1113 = vpop.f32.mrb[0].mxu0
    %v1114 = vadd.f32 0.0, %v1113
    %v1115 = vpop.f32.mrb[0].mxu0
    %1116 = vmatprep.mubr.f32.mxu0 0.0
    %1117 = vmatmul.mubr.f32.gmra.mrb[0].mxu0 %v981
    %v1118 = vpop.f32.mrb[0].mxu0
    %v1119 = vadd.f32 0.0, %v1118
    %v1120 = vpop.f32.mrb[0].mxu0
    %1121 = vmatprep.mubr.f32.mxu0 0.0
    %1122 = vmatmul.mubr.f32.gmra.mrb[0].mxu0 %v984
    %v1123 = vpop.f32.mrb[0].mxu0
    %v1124 = vadd.f32 0.0, %v1123
    %v1125 = vpop.f32.mrb[0].mxu0
    %1126 = vmatprep.mubr.f32.mxu0 0.0
    %1127 = vmatmul.mubr.f32.gmra.mrb[0].mxu0 %v987
    %v1128 = vpop.f32.mrb[0].mxu0
    %v1129 = vadd.f32 0.0, %v1128
    %v1130 = vpop.f32.mrb[0].mxu0
    %1131 = vmatprep.mubr.f32.mxu0 0.0
    %1132 = vmatmul.mubr.f32.gmra.mrb[0].mxu0 %v990
    %v1133 = vpop.f32.mrb[0].mxu0
    %v1134 = vadd.f32 0.0, %v1133
    %v1135 = vpop.f32.mrb[0].mxu0
    %1136 = vdwg.mxu0
    %v1153 = vunpack.c.l.b16 %v713
    %v1154 = vunpack.c.l.b16 %v714
    %v1155 = vunpack.c.l.b16 %v715
    %v1156 = vunpack.c.l.b16 %v716
    %v1157 = vunpack.c.l.b16 %v717
    %v1158 = vunpack.c.l.b16 %v718
    %v1159 = vunpack.c.l.b16 %v719
    %v1160 = vunpack.c.l.b16 %v720
    %v1161 = vunpack.c.l.b16 %v721
    %v1162 = vunpack.c.l.b16 %v722
    %v1163 = vunpack.c.l.b16 %v723
    %v1164 = vunpack.c.l.b16 %v724
    %v1165 = vunpack.c.l.b16 %v725
    %v1166 = vunpack.c.l.b16 %v726
    %v1167 = vunpack.c.l.b16 %v727
    %v1168 = vunpack.c.l.b16 %v728
    %v1169 = vpack.c.b16 %v1154, %v1153
    %v1170 = vpack.c.b16 %v1156, %v1155
    %v1171 = vpack.c.b16 %v1158, %v1157
    %v1172 = vpack.c.b16 %v1160, %v1159
    %v1173 = vpack.c.b16 %v1162, %v1161
    %v1174 = vpack.c.b16 %v1164, %v1163
    %v1175 = vpack.c.b16 %v1166, %v1165
    %v1176 = vpack.c.b16 %v1168, %v1167
    %1185 = vmatprep.subr.bf16.mxu0 0
    %1186 = vmatpush1.bf16.msra.mxu0 %v1169
    %1187 = vmatprep.subr.bf16.mxu0 0
    %1188 = vmatpush1.bf16.msra.mxu0 %v1170
    %1189 = vmatprep.subr.bf16.mxu0 0
    %1190 = vmatpush1.bf16.msra.mxu0 %v1171
    %1191 = vmatprep.subr.bf16.mxu0 0
    %1192 = vmatpush1.bf16.msra.mxu0 %v1172
    %1193 = vmatprep.subr.bf16.mxu0 0
    %1194 = vmatpush1.bf16.msra.mxu0 %v1173
    %1195 = vmatprep.subr.bf16.mxu0 0
    %1196 = vmatpush1.bf16.msra.mxu0 %v1174
    %1197 = vmatprep.subr.bf16.mxu0 0
    %1198 = vmatpush1.bf16.msra.mxu0 %v1175
    %1199 = vmatprep.subr.bf16.mxu0 0
    %1200 = vmatpush1.bf16.msra.mxu0 %v1176
    %1201 = vmatprep.subr.bf16.mxu0 0
    %1202 = vmatpush1.bf16.msra.mxu0 0
    %1203 = vmatprep.subr.bf16.mxu0 0
    %1204 = vmatpush1.bf16.msra.mxu0 0
    %1205 = vmatprep.subr.bf16.mxu0 0
    %1206 = vmatpush1.bf16.msra.mxu0 0
    %1207 = vmatprep.subr.bf16.mxu0 0
    %1208 = vmatpush1.bf16.msra.mxu0 0
    %1209 = vmatprep.subr.bf16.mxu0 0
    %1210 = vmatpush1.bf16.msra.mxu0 0
    %1211 = vmatprep.subr.bf16.mxu0 0
    %1212 = vmatpush1.bf16.msra.mxu0 0
    %1213 = vmatprep.subr.bf16.mxu0 0
    %1214 = vmatpush1.bf16.msra.mxu0 0
    %1215 = vmatprep.subr.bf16.mxu0 0
    %1216 = vmatpush1.bf16.msra.mxu0 0
    %1217 = vmatprep.mubr.bf16.mxu0 0
    %1218 = vmatmul.mubr.bf16.gmra.mrb[0].mxu0 %v705
    %v1219 = vpop.f32.mrb[0].mxu0
    %v1220 = vadd.f32 %v1059, %v1219
    %v1221 = vpop.f32.mrb[0].mxu0
    %v1222 = vpop.f32.mrb[0].mxu0
    %v1223 = vadd.f32 %v1064, %v1222
    %v1224 = vpop.f32.mrb[0].mxu0
    %1225 = vmatprep.mubr.bf16.mxu0 0
    %1226 = vmatmul.mubr.bf16.gmra.mrb[0].mxu0 %v706
    %v1227 = vpop.f32.mrb[0].mxu0
    %v1228 = vadd.f32 %v1069, %v1227
    %v1229 = vpop.f32.mrb[0].mxu0
    %v1230 = vpop.f32.mrb[0].mxu0
    %v1231 = vadd.f32 %v1074, %v1230
    %v1232 = vpop.f32.mrb[0].mxu0
    %1233 = vmatprep.mubr.bf16.mxu0 0
    %1234 = vmatmul.mubr.bf16.gmra.mrb[0].mxu0 %v707
    %v1235 = vpop.f32.mrb[0].mxu0
    %v1236 = vadd.f32 %v1079, %v1235
    %v1237 = vpop.f32.mrb[0].mxu0
    %v1238 = vpop.f32.mrb[0].mxu0
    %v1239 = vadd.f32 %v1084, %v1238
    %v1240 = vpop.f32.mrb[0].mxu0
    %1241 = vmatprep.mubr.bf16.mxu0 0
    %1242 = vmatmul.mubr.bf16.gmra.mrb[0].mxu0 %v708
    %v1243 = vpop.f32.mrb[0].mxu0
    %v1244 = vadd.f32 %v1089, %v1243
    %v1245 = vpop.f32.mrb[0].mxu0
    %v1246 = vpop.f32.mrb[0].mxu0
    %v1247 = vadd.f32 %v1094, %v1246
    %v1248 = vpop.f32.mrb[0].mxu0
    %1249 = vmatprep.mubr.bf16.mxu0 0
    %1250 = vmatmul.mubr.bf16.gmra.mrb[0].mxu0 %v709
    %v1251 = vpop.f32.mrb[0].mxu0
    %v1252 = vadd.f32 %v1099, %v1251
    %v1253 = vpop.f32.mrb[0].mxu0
    %v1254 = vpop.f32.mrb[0].mxu0
    %v1255 = vadd.f32 %v1104, %v1254
    %v1256 = vpop.f32.mrb[0].mxu0
    %1257 = vmatprep.mubr.bf16.mxu0 0
    %1258 = vmatmul.mubr.bf16.gmra.mrb[0].mxu0 %v710
    %v1259 = vpop.f32.mrb[0].mxu0
    %v1260 = vadd.f32 %v1109, %v1259
    %v1261 = vpop.f32.mrb[0].mxu0
    %v1262 = vpop.f32.mrb[0].mxu0
    %v1263 = vadd.f32 %v1114, %v1262
    %v1264 = vpop.f32.mrb[0].mxu0
    %1265 = vmatprep.mubr.bf16.mxu0 0
    %1266 = vmatmul.mubr.bf16.gmra.mrb[0].mxu0 %v711
    %v1267 = vpop.f32.mrb[0].mxu0
    %v1268 = vadd.f32 %v1119, %v1267
    %v1269 = vpop.f32.mrb[0].mxu0
    %v1270 = vpop.f32.mrb[0].mxu0
    %v1271 = vadd.f32 %v1124, %v1270
    %v1272 = vpop.f32.mrb[0].mxu0
    %1273 = vmatprep.mubr.bf16.mxu0 0
    %1274 = vmatmul.mubr.bf16.gmra.mrb[0].mxu0 %v712
    %v1275 = vpop.f32.mrb[0].mxu0
    %v1276 = vadd.f32 %v1129, %v1275
    %v1277 = vpop.f32.mrb[0].mxu0
    %v1278 = vpop.f32.mrb[0].mxu0
    %v1279 = vadd.f32 %v1134, %v1278
    %v1280 = vpop.f32.mrb[0].mxu0
    %1281 = vdwg.mxu0
    %v1282 = vtanh.pop %v1220
    %v1283 = vtanh.pop %v1223
    %v1284 = vtanh.pop %v1228
    %v1285 = vtanh.pop %v1231
    %v1286 = vtanh.pop %v1236
    %v1287 = vtanh.pop %v1239
    %v1288 = vtanh.pop %v1244
    %v1289 = vtanh.pop %v1247
    %v1290 = vtanh.pop %v1252
    %v1291 = vtanh.pop %v1255
    %v1292 = vtanh.pop %v1260
    %v1293 = vtanh.pop %v1263
    %v1294 = vtanh.pop %v1268
    %v1295 = vtanh.pop %v1271
    %v1296 = vtanh.pop %v1276
    %v1297 = vtanh.pop %v1279
    %v1298 = vld [vmem:[%s11] sm:$0x1]
    %v1300 = vlaneseq
    %v1301 = vshrl.u32 %v1300, 7
    %v1302 = vsub.s32 0, %v1301
    %v1303 = vrot.slane %v1298, %v1302
    %v1305 = vmul.f32 %v1282, %v1303
    %v1306 = vmul.f32 %v1283, %v1303
    %v1307 = vmul.f32 %v1284, %v1303
    %v1308 = vmul.f32 %v1285, %v1303
    %v1309 = vmul.f32 %v1286, %v1303
    %v1310 = vmul.f32 %v1287, %v1303
    %v1311 = vmul.f32 %v1288, %v1303
    %v1312 = vmul.f32 %v1289, %v1303
    %v1313 = vmul.f32 %v1290, %v1303
    %v1314 = vmul.f32 %v1291, %v1303
    %v1315 = vmul.f32 %v1292, %v1303
    %v1316 = vmul.f32 %v1293, %v1303
    %v1317 = vmul.f32 %v1294, %v1303
    %v1318 = vmul.f32 %v1295, %v1303
    %v1319 = vmul.f32 %v1296, %v1303
    %v1320 = vmul.f32 %v1297, %v1303
    %1321 = vadd.xlane.f32.xlu0 %v1305
    %v1322 = vpop.xlane.xlu0 %1321
    %1323 = vadd.xlane.f32.xlu0 %v1306
    %v1324 = vpop.xlane.xlu0 %1323
    %1325 = vadd.xlane.f32.xlu0 %v1307
    %v1326 = vpop.xlane.xlu0 %1325
    %1327 = vadd.xlane.f32.xlu0 %v1308
    %v1328 = vpop.xlane.xlu0 %1327
    %1329 = vadd.xlane.f32.xlu0 %v1309
    %v1330 = vpop.xlane.xlu0 %1329
    %1331 = vadd.xlane.f32.xlu0 %v1310
    %v1332 = vpop.xlane.xlu0 %1331
    %1333 = vadd.xlane.f32.xlu0 %v1311
    %v1334 = vpop.xlane.xlu0 %1333
    %1335 = vadd.xlane.f32.xlu0 %v1312
    %v1336 = vpop.xlane.xlu0 %1335
    %1337 = vadd.xlane.f32.xlu0 %v1313
    %v1338 = vpop.xlane.xlu0 %1337
    %1339 = vadd.xlane.f32.xlu0 %v1314
    %v1340 = vpop.xlane.xlu0 %1339
    %1341 = vadd.xlane.f32.xlu0 %v1315
    %v1342 = vpop.xlane.xlu0 %1341
    %1343 = vadd.xlane.f32.xlu0 %v1316
    %v1344 = vpop.xlane.xlu0 %1343
    %1345 = vadd.xlane.f32.xlu0 %v1317
    %v1346 = vpop.xlane.xlu0 %1345
    %1347 = vadd.xlane.f32.xlu0 %v1318
    %v1348 = vpop.xlane.xlu0 %1347
    %1349 = vadd.xlane.f32.xlu0 %v1319
    %v1350 = vpop.xlane.xlu0 %1349
    %1351 = vadd.xlane.f32.xlu0 %v1320
    %v1352 = vpop.xlane.xlu0 %1351
    %v1353 = vmax.f32 %v1322, %v1324
    %v1354 = vrot.slane %v1353, 4
    %v1355 = vmax.f32 %v1353, %v1354
    %v1356 = vrot.slane %v1355, 2
    %v1357 = vmax.f32 %v1355, %v1356
    %v1358 = vrot.slane %v1357, 1
    %v1359 = vmax.f32 %v1357, %v1358
    %v1360 = vmax.f32 %v1326, %v1328
    %v1361 = vrot.slane %v1360, 4
    %v1362 = vmax.f32 %v1360, %v1361
    %v1363 = vrot.slane %v1362, 2
    %v1364 = vmax.f32 %v1362, %v1363
    %v1365 = vrot.slane %v1364, 1
    %v1366 = vmax.f32 %v1364, %v1365
    %v1367 = vmax.f32 %v1330, %v1332
    %v1368 = vrot.slane %v1367, 4
    %v1369 = vmax.f32 %v1367, %v1368
    %v1370 = vrot.slane %v1369, 2
    %v1371 = vmax.f32 %v1369, %v1370
    %v1372 = vrot.slane %v1371, 1
    %v1373 = vmax.f32 %v1371, %v1372
    %v1374 = vmax.f32 %v1334, %v1336
    %v1375 = vrot.slane %v1374, 4
    %v1376 = vmax.f32 %v1374, %v1375
    %v1377 = vrot.slane %v1376, 2
    %v1378 = vmax.f32 %v1376, %v1377
    %v1379 = vrot.slane %v1378, 1
    %v1380 = vmax.f32 %v1378, %v1379
    %v1381 = vmax.f32 %v1338, %v1340
    %v1382 = vrot.slane %v1381, 4
    %v1383 = vmax.f32 %v1381, %v1382
    %v1384 = vrot.slane %v1383, 2
    %v1385 = vmax.f32 %v1383, %v1384
    %v1386 = vrot.slane %v1385, 1
    %v1387 = vmax.f32 %v1385, %v1386
    %v1388 = vmax.f32 %v1342, %v1344
    %v1389 = vrot.slane %v1388, 4
    %v1390 = vmax.f32 %v1388, %v1389
    %v1391 = vrot.slane %v1390, 2
    %v1392 = vmax.f32 %v1390, %v1391
    %v1393 = vrot.slane %v1392, 1
    %v1394 = vmax.f32 %v1392, %v1393
    %v1395 = vmax.f32 %v1346, %v1348
    %v1396 = vrot.slane %v1395, 4
    %v1397 = vmax.f32 %v1395, %v1396
    %v1398 = vrot.slane %v1397, 2
    %v1399 = vmax.f32 %v1397, %v1398
    %v1400 = vrot.slane %v1399, 1
    %v1401 = vmax.f32 %v1399, %v1400
    %v1402 = vmax.f32 %v1350, %v1352
    %v1403 = vrot.slane %v1402, 4
    %v1404 = vmax.f32 %v1402, %v1403
    %v1405 = vrot.slane %v1404, 2
    %v1406 = vmax.f32 %v1404, %v1405
    %v1407 = vrot.slane %v1406, 1
    %v1408 = vmax.f32 %v1406, %v1407
    %v1409 = vsub.f32 %v1322, %v1359
    %v1410 = vsub.f32 %v1324, %v1359
    %v1411 = vsub.f32 %v1326, %v1366
    %v1412 = vsub.f32 %v1328, %v1366
    %v1413 = vsub.f32 %v1330, %v1373
    %v1414 = vsub.f32 %v1332, %v1373
    %v1415 = vsub.f32 %v1334, %v1380
    %v1416 = vsub.f32 %v1336, %v1380
    %v1417 = vsub.f32 %v1338, %v1387
    %v1418 = vsub.f32 %v1340, %v1387
    %v1419 = vsub.f32 %v1342, %v1394
    %v1420 = vsub.f32 %v1344, %v1394
    %v1421 = vsub.f32 %v1346, %v1401
    %v1422 = vsub.f32 %v1348, %v1401
    %v1423 = vsub.f32 %v1350, %v1408
    %v1424 = vsub.f32 %v1352, %v1408
    %v1425 = vmul.f32 %v1409, 1.442695
    %v1426 = vpow.pop %v1425
    %v1427 = vmul.f32 %v1410, 1.442695
    %v1428 = vpow.pop %v1427
    %v1429 = vmul.f32 %v1411, 1.442695
    %v1430 = vpow.pop %v1429
    %v1431 = vmul.f32 %v1412, 1.442695
    %v1432 = vpow.pop %v1431
    %v1433 = vmul.f32 %v1413, 1.442695
    %v1434 = vpow.pop %v1433
    %v1435 = vmul.f32 %v1414, 1.442695
    %v1436 = vpow.pop %v1435
    %v1437 = vmul.f32 %v1415, 1.442695
    %v1438 = vpow.pop %v1437
    %v1439 = vmul.f32 %v1416, 1.442695
    %v1440 = vpow.pop %v1439
    %v1441 = vmul.f32 %v1417, 1.442695
    %v1442 = vpow.pop %v1441
    %v1443 = vmul.f32 %v1418, 1.442695
    %v1444 = vpow.pop %v1443
    %v1445 = vmul.f32 %v1419, 1.442695
    %v1446 = vpow.pop %v1445
    %v1447 = vmul.f32 %v1420, 1.442695
    %v1448 = vpow.pop %v1447
    %v1449 = vmul.f32 %v1421, 1.442695
    %v1450 = vpow.pop %v1449
    %v1451 = vmul.f32 %v1422, 1.442695
    %v1452 = vpow.pop %v1451
    %v1453 = vmul.f32 %v1423, 1.442695
    %v1454 = vpow.pop %v1453
    %v1455 = vmul.f32 %v1424, 1.442695
    %v1456 = vpow.pop %v1455
    %v1457 = vadd.f32 %v1426, %v1428
    %v1458 = vrot.slane %v1457, 4
    %v1459 = vadd.f32 %v1457, %v1458
    %v1460 = vrot.slane %v1459, 2
    %v1461 = vadd.f32 %v1459, %v1460
    %v1462 = vrot.slane %v1461, 1
    %v1463 = vadd.f32 %v1461, %v1462
    %v1464 = vadd.f32 %v1430, %v1432
    %v1465 = vrot.slane %v1464, 4
    %v1466 = vadd.f32 %v1464, %v1465
    %v1467 = vrot.slane %v1466, 2
    %v1468 = vadd.f32 %v1466, %v1467
    %v1469 = vrot.slane %v1468, 1
    %v1470 = vadd.f32 %v1468, %v1469
    %v1471 = vadd.f32 %v1434, %v1436
    %v1472 = vrot.slane %v1471, 4
    %v1473 = vadd.f32 %v1471, %v1472
    %v1474 = vrot.slane %v1473, 2
    %v1475 = vadd.f32 %v1473, %v1474
    %v1476 = vrot.slane %v1475, 1
    %v1477 = vadd.f32 %v1475, %v1476
    %v1478 = vadd.f32 %v1438, %v1440
    %v1479 = vrot.slane %v1478, 4
    %v1480 = vadd.f32 %v1478, %v1479
    %v1481 = vrot.slane %v1480, 2
    %v1482 = vadd.f32 %v1480, %v1481
    %v1483 = vrot.slane %v1482, 1
    %v1484 = vadd.f32 %v1482, %v1483
    %v1485 = vadd.f32 %v1442, %v1444
    %v1486 = vrot.slane %v1485, 4
    %v1487 = vadd.f32 %v1485, %v1486
    %v1488 = vrot.slane %v1487, 2
    %v1489 = vadd.f32 %v1487, %v1488
    %v1490 = vrot.slane %v1489, 1
    %v1491 = vadd.f32 %v1489, %v1490
    %v1492 = vadd.f32 %v1446, %v1448
    %v1493 = vrot.slane %v1492, 4
    %v1494 = vadd.f32 %v1492, %v1493
    %v1495 = vrot.slane %v1494, 2
    %v1496 = vadd.f32 %v1494, %v1495
    %v1497 = vrot.slane %v1496, 1
    %v1498 = vadd.f32 %v1496, %v1497
    %v1499 = vadd.f32 %v1450, %v1452
    %v1500 = vrot.slane %v1499, 4
    %v1501 = vadd.f32 %v1499, %v1500
    %v1502 = vrot.slane %v1501, 2
    %v1503 = vadd.f32 %v1501, %v1502
    %v1504 = vrot.slane %v1503, 1
    %v1505 = vadd.f32 %v1503, %v1504
    %v1506 = vadd.f32 %v1454, %v1456
    %v1507 = vrot.slane %v1506, 4
    %v1508 = vadd.f32 %v1506, %v1507
    %v1509 = vrot.slane %v1508, 2
    %v1510 = vadd.f32 %v1508, %v1509
    %v1511 = vrot.slane %v1510, 1
    %v1512 = vadd.f32 %v1510, %v1511
    %v1513 = vrcp.pop %v1463
    %v1514 = vrcp.pop %v1470
    %v1515 = vrcp.pop %v1477
    %v1516 = vrcp.pop %v1484
    %v1517 = vrcp.pop %v1491
    %v1518 = vrcp.pop %v1498
    %v1519 = vrcp.pop %v1505
    %v1520 = vrcp.pop %v1512
    %v1521 = vmul.f32 %v1426, %v1513
    %v1522 = vmul.f32 %v1428, %v1513
    %v1523 = vmul.f32 %v1430, %v1514
    %v1524 = vmul.f32 %v1432, %v1514
    %v1525 = vmul.f32 %v1434, %v1515
    %v1526 = vmul.f32 %v1436, %v1515
    %v1527 = vmul.f32 %v1438, %v1516
    %v1528 = vmul.f32 %v1440, %v1516
    %v1529 = vmul.f32 %v1442, %v1517
    %v1530 = vmul.f32 %v1444, %v1517
    %v1531 = vmul.f32 %v1446, %v1518
    %v1532 = vmul.f32 %v1448, %v1518
    %v1533 = vmul.f32 %v1450, %v1519
    %v1534 = vmul.f32 %v1452, %v1519
    %v1535 = vmul.f32 %v1454, %v1520
    %v1536 = vmul.f32 %v1456, %v1520
    %v1537 = vmul.f32 %v1521, %v689
    %v1538 = vmul.f32 %v1522, %v690
    %v1539 = vmul.f32 %v1523, %v691
    %v1540 = vmul.f32 %v1524, %v692
    %v1541 = vmul.f32 %v1525, %v693
    %v1542 = vmul.f32 %v1526, %v694
    %v1543 = vmul.f32 %v1527, %v695
    %v1544 = vmul.f32 %v1528, %v696
    %v1545 = vmul.f32 %v1529, %v697
    %v1546 = vmul.f32 %v1530, %v698
    %v1547 = vmul.f32 %v1531, %v699
    %v1548 = vmul.f32 %v1532, %v700
    %v1549 = vmul.f32 %v1533, %v701
    %v1550 = vmul.f32 %v1534, %v702
    %v1551 = vmul.f32 %v1535, %v703
    %v1552 = vmul.f32 %v1536, %v704
    %v1553 = vadd.f32 %v1537, %v1538
    %v1554 = vrot.slane %v1553, 4
    %v1555 = vadd.f32 %v1553, %v1554
    %v1556 = vrot.slane %v1555, 2
    %v1557 = vadd.f32 %v1555, %v1556
    %v1558 = vrot.slane %v1557, 1
    %v1559 = vadd.f32 %v1557, %v1558
    %v1560 = vadd.f32 %v1539, %v1540
    %v1561 = vrot.slane %v1560, 4
    %v1562 = vadd.f32 %v1560, %v1561
    %v1563 = vrot.slane %v1562, 2
    %v1564 = vadd.f32 %v1562, %v1563
    %v1565 = vrot.slane %v1564, 1
    %v1566 = vadd.f32 %v1564, %v1565
    %v1567 = vadd.f32 %v1541, %v1542
    %v1568 = vrot.slane %v1567, 4
    %v1569 = vadd.f32 %v1567, %v1568
    %v1570 = vrot.slane %v1569, 2
    %v1571 = vadd.f32 %v1569, %v1570
    %v1572 = vrot.slane %v1571, 1
    %v1573 = vadd.f32 %v1571, %v1572
    %v1574 = vadd.f32 %v1543, %v1544
    %v1575 = vrot.slane %v1574, 4
    %v1576 = vadd.f32 %v1574, %v1575
    %v1577 = vrot.slane %v1576, 2
    %v1578 = vadd.f32 %v1576, %v1577
    %v1579 = vrot.slane %v1578, 1
    %v1580 = vadd.f32 %v1578, %v1579
    %v1581 = vadd.f32 %v1545, %v1546
    %v1582 = vrot.slane %v1581, 4
    %v1583 = vadd.f32 %v1581, %v1582
    %v1584 = vrot.slane %v1583, 2
    %v1585 = vadd.f32 %v1583, %v1584
    %v1586 = vrot.slane %v1585, 1
    %v1587 = vadd.f32 %v1585, %v1586
    %v1588 = vadd.f32 %v1547, %v1548
    %v1589 = vrot.slane %v1588, 4
    %v1590 = vadd.f32 %v1588, %v1589
    %v1591 = vrot.slane %v1590, 2
    %v1592 = vadd.f32 %v1590, %v1591
    %v1593 = vrot.slane %v1592, 1
    %v1594 = vadd.f32 %v1592, %v1593
    %v1595 = vadd.f32 %v1549, %v1550
    %v1596 = vrot.slane %v1595, 4
    %v1597 = vadd.f32 %v1595, %v1596
    %v1598 = vrot.slane %v1597, 2
    %v1599 = vadd.f32 %v1597, %v1598
    %v1600 = vrot.slane %v1599, 1
    %v1601 = vadd.f32 %v1599, %v1600
    %v1602 = vadd.f32 %v1551, %v1552
    %v1603 = vrot.slane %v1602, 4
    %v1604 = vadd.f32 %v1602, %v1603
    %v1605 = vrot.slane %v1604, 2
    %v1606 = vadd.f32 %v1604, %v1605
    %v1607 = vrot.slane %v1606, 1
    %v1608 = vadd.f32 %v1606, %v1607
    %v1625 = vlaneseq
    %v1626 = vshrl.u32 %v1625, 7
    %v1627 = vsub.s32 %v859, %v1626
    %v1628 = vrot.slane %v1521, %v1627
    %v1629 = vadd.s32 %v859, 4294967288
    %v1630 = vlaneseq
    %v1631 = vshrl.u32 %v1630, 7
    %v1632 = vsub.s32 %v1629, %v1631
    %v1633 = vrot.slane %v1522, %v1632
    %vm1634 = vcmask 130112
    %v1635 = vsel %vm1634, %v1633, %v1628
    %v1636 = vlaneseq
    %v1637 = vshrl.u32 %v1636, 7
    %v1638 = vsub.s32 %v859, %v1637
    %v1639 = vrot.slane %v1523, %v1638
    %v1640 = vlaneseq
    %v1641 = vshrl.u32 %v1640, 7
    %v1642 = vsub.s32 %v1629, %v1641
    %v1643 = vrot.slane %v1524, %v1642
    %v1644 = vsel %vm1634, %v1643, %v1639
    %v1645 = vlaneseq
    %v1646 = vshrl.u32 %v1645, 7
    %v1647 = vsub.s32 %v859, %v1646
    %v1648 = vrot.slane %v1525, %v1647
    %v1649 = vlaneseq
    %v1650 = vshrl.u32 %v1649, 7
    %v1651 = vsub.s32 %v1629, %v1650
    %v1652 = vrot.slane %v1526, %v1651
    %v1653 = vsel %vm1634, %v1652, %v1648
    %v1654 = vlaneseq
    %v1655 = vshrl.u32 %v1654, 7
    %v1656 = vsub.s32 %v859, %v1655
    %v1657 = vrot.slane %v1527, %v1656
    %v1658 = vlaneseq
    %v1659 = vshrl.u32 %v1658, 7
    %v1660 = vsub.s32 %v1629, %v1659
    %v1661 = vrot.slane %v1528, %v1660
    %v1662 = vsel %vm1634, %v1661, %v1657
    %v1663 = vlaneseq
    %v1664 = vshrl.u32 %v1663, 7
    %v1665 = vsub.s32 %v859, %v1664
    %v1666 = vrot.slane %v1529, %v1665
    %v1667 = vlaneseq
    %v1668 = vshrl.u32 %v1667, 7
    %v1669 = vsub.s32 %v1629, %v1668
    %v1670 = vrot.slane %v1530, %v1669
    %v1671 = vsel %vm1634, %v1670, %v1666
    %v1672 = vlaneseq
    %v1673 = vshrl.u32 %v1672, 7
    %v1674 = vsub.s32 %v859, %v1673
    %v1675 = vrot.slane %v1531, %v1674
    %v1676 = vlaneseq
    %v1677 = vshrl.u32 %v1676, 7
    %v1678 = vsub.s32 %v1629, %v1677
    %v1679 = vrot.slane %v1532, %v1678
    %v1680 = vsel %vm1634, %v1679, %v1675
    %v1681 = vlaneseq
    %v1682 = vshrl.u32 %v1681, 7
    %v1683 = vsub.s32 %v859, %v1682
    %v1684 = vrot.slane %v1533, %v1683
    %v1685 = vlaneseq
    %v1686 = vshrl.u32 %v1685, 7
    %v1687 = vsub.s32 %v1629, %v1686
    %v1688 = vrot.slane %v1534, %v1687
    %v1689 = vsel %vm1634, %v1688, %v1684
    %v1690 = vlaneseq
    %v1691 = vshrl.u32 %v1690, 7
    %v1692 = vsub.s32 %v859, %v1691
    %v1693 = vrot.slane %v1535, %v1692
    %v1694 = vlaneseq
    %v1695 = vshrl.u32 %v1694, 7
    %v1696 = vsub.s32 %v1629, %v1695
    %v1697 = vrot.slane %v1536, %v1696
    %v1698 = vsel %vm1634, %v1697, %v1693
    %vm1699 = vcmask 1041409
    %v1700 = vsel %vm1699, %v1644, %v1635
    %vm1701 = vcmask 1042434
    %v1702 = vsel %vm1701, %v1653, %v1700
    %vm1703 = vcmask 1043459
    %v1704 = vsel %vm1703, %v1662, %v1702
    %vm1705 = vcmask 1044484
    %v1706 = vsel %vm1705, %v1671, %v1704
    %vm1707 = vcmask 1045509
    %v1708 = vsel %vm1707, %v1680, %v1706
    %vm1709 = vcmask 1046534
    %v1710 = vsel %vm1709, %v1689, %v1708
    %vm1711 = vcmask 1047559
    %v1712 = vsel %vm1711, %v1698, %v1710
    %vm1714 = vcmask 130048
    %1715 = vst.msk [vmem:[#allocation18] sm:$0xff] %vm1714, %v1712
    %v1724 = vsel %vm1699, %v1566, %v1559
    %v1725 = vsel %vm1701, %v1573, %v1724
    %v1726 = vsel %vm1703, %v1580, %v1725
    %v1727 = vsel %vm1705, %v1587, %v1726
    %v1728 = vsel %vm1707, %v1594, %v1727
    %v1729 = vsel %vm1709, %v1601, %v1728
    %v1730 = vsel %vm1711, %v1608, %v1729
    %v1732 = vpack.c.bf16 %v1730, %v1730
    %v1735 = vunpack.c.l.b16 %v729
    %v1736 = vunpack.c.l.b16 %v1732
    %v1737 = vpack.c.b16 %v1736, %v1735
    %1739 = vst [vmem:[#allocation16] sm:$0xff] %v1737
    %v1740 = vld [vmem:[%s12] sm:$0x7]
    %v1742 = vlaneseq
    %v1743 = vshrl.u32 %v1742, 7
    %v1744 = vsub.s32 0, %v1743
    %v1745 = vrot.slane %v1740, %v1744
    %v1746 = vlaneseq
    %v1747 = vshrl.u32 %v1746, 7
    %v1748 = vsub.s32 1, %v1747
    %v1749 = vrot.slane %v1740, %v1748
    %v1750 = vlaneseq
    %v1751 = vshrl.u32 %v1750, 7
    %v1752 = vsub.s32 2, %v1751
    %v1753 = vrot.slane %v1740, %v1752
    %v1757 = vmul.f32 %v1730, %v1745
    %v1758 = vmul.f32 %v687, %v1749
    %v1759 = vmul.f32 %v149, %v1753
    %v1760 = vadd.f32 %v1757, %v1758
    %v1761 = vadd.f32 %v1760, %v1759
    %1762 = vadd.xlane.f32.xlu0 %v1761
    %v1763 = vpop.xlane.xlu0 %1762
    %v1764 = vld [vmem:[#allocation2] sm:$0x1]
    %v1766 = vlaneseq
    %v1767 = vshrl.u32 %v1766, 7
    %v1768 = vsub.s32 0, %v1767
    %v1769 = vrot.slane %v1764, %v1768
    %v1771 = vadd.f32 %v1763, %v1769
    %v1772 = vsub.f32 0.0, %v1771
    %v1773 = vmul.f32 %v1772, 1.442695
    %v1774 = vpow.pop %v1773
    %v1775 = vadd.f32 %v1774, 1.0
    %v1776 = vrcp.pop %v1775
    %vm1777 = vcmask 7168
    %1778 = vst.msk [vmem:[%s16] sm:$0xff] %vm1777, %v1776
    %v1779 = vsub.f32 1.0, %v1776
    %1781 = vset.pattern.permute.xlu0 0
    %1782 = vperm.xlu0 %1781, %v1779
    %v1783 = vpop.permute.xlu0 %1782
    %v1785 = vmul.f32 %v1783, %v1712
    %v1786 = vld [vmem:[%s3] sm:$0xff]
    %v1787 = vmul.f32 %v1785, %v1786
    %1788 = vst.msk [vmem:[#allocation19] sm:$0xff] %vm1714, %v1787
    // Predicated region
    $region86: #{tpu_custom_call.1} parent=1 // pred_check
      _
    $region87: #{tpu_custom_call.1} parent=1 // pred_check_branch
      %1790 = sbr.rel (0) target = $region89
    $region88: #{tpu_custom_call.1} parent=1 // pred_region
      %s1792 = ssub.s32 128, 128
      %1793 = vsyncadd [#allocation5], %s1792
      %s1795 = sshll.u32 [#allocation15], 4
      %s1796 = int_to_ptr.vmem [resolvable:$true] %s1795
      %1798 = dma.vmem_to_hbm [thread:$0]  %s1796, 128, %s14, [#allocation5]
    $region89: #{tpu_custom_call.1} parent=1 // pred_fallthru
      _
    // Predicated region
    $region90: #{tpu_custom_call.1} parent=1 // pred_check
      _
    $region91: #{tpu_custom_call.1} parent=1 // pred_check_branch
      %1800 = sbr.rel (0) target = $region93
    $region92: #{tpu_custom_call.1} parent=1 // pred_region
      %s1802 = ssub.s32 128, 128
      %1803 = vsyncadd [#allocation17], %s1802
      %s1805 = sshll.u32 [#allocation16], 4
      %s1806 = int_to_ptr.vmem [resolvable:$true] %s1805
      %1808 = dma.vmem_to_hbm [thread:$0]  %s1806, 128, %s15, [#allocation17]
    $region93: #{tpu_custom_call.1} parent=1 // pred_fallthru
      _
    // Predicated region
    $region94: #{tpu_custom_call.1} parent=1 // pred_check
      _
    $region95: #{tpu_custom_call.1} parent=1 // pred_check_branch
      %1810 = sbr.rel (0) target = $region97
    $region96: #{tpu_custom_call.1} parent=1 // pred_region
      _
    $region97: #{tpu_custom_call.1} parent=1 // pred_fallthru
      _
    // Predicated region
    $region98: #{tpu_custom_call.1} parent=1 // pred_check
      _
    $region99: #{tpu_custom_call.1} parent=1 // pred_check_branch
      %1812 = sbr.rel (0) target = $region101
    $region100: #{tpu_custom_call.1} parent=1 // pred_region
      %s1814 = ssub.s32 128, 128
      %1815 = vsyncadd [#allocation17], %s1814
      %s1817 = sshll.u32 [#allocation18], 4
      %s1818 = int_to_ptr.vmem [resolvable:$true] %s1817
      %1820 = dma.vmem_to_hbm [thread:$0]  %s1818, 128, %s17, [#allocation17]
    $region101: #{tpu_custom_call.1} parent=1 // pred_fallthru
      _
    // Predicated region
    $region102: #{tpu_custom_call.1} parent=1 // pred_check
      _
    $region103: #{tpu_custom_call.1} parent=1 // pred_check_branch
      %1822 = sbr.rel (0) target = $region105
    $region104: #{tpu_custom_call.1} parent=1 // pred_region
      %s1824 = ssub.s32 128, 128
      %1825 = vsyncadd [#allocation20], %s1824
      %s1827 = sshll.u32 [#allocation19], 4
      %s1828 = int_to_ptr.vmem [resolvable:$true] %s1827
      %1830 = dma.vmem_to_hbm [thread:$0]  %s1828, 128, %s18, [#allocation20]
    $region105: #{tpu_custom_call.1} parent=1 // pred_fallthru
      _
    // Predicated region
    $region106: #{tpu_custom_call.1} parent=1 // pred_check
      _
    $region107: #{tpu_custom_call.1} parent=1 // pred_check_branch
      %1832 = sbr.rel (0) target = $region109
    $region108: #{tpu_custom_call.1} parent=1 // pred_region
      %1833 = dma.done [#allocation5], 128
    $region109: #{tpu_custom_call.1} parent=1 // pred_fallthru
      _
    // Predicated region
    $region110: #{tpu_custom_call.1} parent=1 // pred_check
      _
    $region111: #{tpu_custom_call.1} parent=1 // pred_check_branch
      %1835 = sbr.rel (0) target = $region113
    $region112: #{tpu_custom_call.1} parent=1 // pred_region
      %1836 = dma.done [#allocation17], 128
    $region113: #{tpu_custom_call.1} parent=1 // pred_fallthru
      _
    // Predicated region
    $region114: #{tpu_custom_call.1} parent=1 // pred_check
      _
    $region115: #{tpu_custom_call.1} parent=1 // pred_check_branch
      %1838 = sbr.rel (0) target = $region117
    $region116: #{tpu_custom_call.1} parent=1 // pred_region
      _
    $region117: #{tpu_custom_call.1} parent=1 // pred_fallthru
      _
    // Predicated region
    $region118: #{tpu_custom_call.1} parent=1 // pred_check
      _
    $region119: #{tpu_custom_call.1} parent=1 // pred_check_branch
      %1840 = sbr.rel (0) target = $region121
    $region120: #{tpu_custom_call.1} parent=1 // pred_region
      %1841 = dma.done [#allocation17], 128
    $region121: #{tpu_custom_call.1} parent=1 // pred_fallthru
      _
    // Predicated region
    $region122: #{tpu_custom_call.1} parent=1 // pred_check
      _
    $region123: #{tpu_custom_call.1} parent=1 // pred_check_branch
      %1843 = sbr.rel (0) target = $region125
    $region124: #{tpu_custom_call.1} parent=1 // pred_region
      %1844 = dma.done [#allocation20], 128
    $region125: #{tpu_custom_call.1} parent=1 // pred_fallthru
      _
    %1845 = vsyncpa [#allocation4], 1
    %1846 = vsyncpa [#allocation7], 1
    %1847 = vsyncpa [#allocation10], 1
    %1848 = vsyncpa [#allocation13], 1
    %1849 = vsyncpa [#allocation5], 1
    %1850 = vsyncpa [#allocation17], 1
    %1851 = vsyncpa [#allocation20], 1

</llo_original>
